<compile_context>
chip_gen: v6e
topology: v6e:2x2x1
jax: 0.10.0
libtpu: 0.0.40
codegen_flags: <defaults>
</compile_context>

<pallas_src>
import functools

import jax
import jax.numpy as jnp
from jax.experimental import pallas as pl
from jax.experimental.pallas import tpu as pltpu


# ----------------------------------------------------------------------------
# Fused kernel: qkv projection -> per-head SDPA -> output projection
# One program = one batch element; all H heads handled with batched einsums.
# ----------------------------------------------------------------------------
def _attention_kernel(x_ref, wqkv_ref, wproj_ref, bproj_ref, o_ref, *, scale):
    # x_ref:     (1, N, C)      activation block for this batch element
    # wqkv_ref:  (H, C, 3D)     head-major qkv weight (columns = [q|k|v] per head)
    # wproj_ref: (H, D, C)      head-major proj weight (rows grouped by head)
    # bproj_ref: (1, C)         proj bias
    # o_ref:     (1, N, C)      output block
    H, C, E = wqkv_ref.shape
    D = E // 3
    x = x_ref[0]                                           # (N, C), f32
    N = x.shape[0]

    # Head-batched qkv projection: (H, N, C) @ (H, C, 3D) -> (H, N, 3D).
    # (broadcast hoisted: called exactly once per program)
    xh = jnp.broadcast_to(x[None, :, :], (H, N, C))
    qkv = jnp.einsum("hnc,hce->hne", xh, wqkv_ref[...],
                     preferred_element_type=jnp.float32)   # (H, N, 3D)

    # Scale q (N*D elements) instead of the (N, N) score matrix.
    q = qkv[:, :, 0:D] * scale                             # (H, N, D)
    k = qkv[:, :, D:2 * D]                                 # (H, N, D)
    v = qkv[:, :, 2 * D:3 * D]                             # (H, N, D)

    # Scores + numerically-stable softmax (all heads at once).
    s = jnp.einsum("hnd,hmd->hnm", q, k,
                   preferred_element_type=jnp.float32)     # (H, N, N)
    s = s - jnp.max(s, axis=-1, keepdims=True)
    p = jnp.exp(s)
    p = p * pl.reciprocal(jnp.sum(p, axis=-1, keepdims=True), approx=True)

    # Attention-weighted values, per head.
    o = jnp.einsum("hnm,hmd->hnd", p, v,
                   preferred_element_type=jnp.float32)     # (H, N, D)

    # Output projection: per-head partial products reduced over heads.
    # Equivalent to (attn @ v).transpose(1,2).reshape(N, C) @ Wp + b,
    # but without ever materializing the head-transposed activation.
    y = jnp.einsum("hnd,hdc->hnc", o, wproj_ref[...],
                   preferred_element_type=jnp.float32)     # (H, N, C)
    y = jnp.sum(y, axis=0) + bproj_ref[...]                # (N, C)

    o_ref[0] = y.astype(o_ref.dtype)


# ----------------------------------------------------------------------------
# One-time weight rearrangement into the head-major kernel layout.
# (Weights only — tiny tensors, would be done once at model load time.)
# ----------------------------------------------------------------------------
def prepare_params(params, num_heads):
    w_qkv = params["w_qkv"]            # (C, 3C)  pre-transposed (in, out)
    w_proj = params["w_proj"]          # (C, C)   pre-transposed (in, out)
    b_proj = params["b_proj"]          # (C,)
    C = w_qkv.shape[0]
    D = C // num_heads

    # qkv output columns are ordered (3, H, D) — matches reshape(B,N,3,H,D).
    # Rearrange to (H, C, 3D) so each head's [q|k|v] columns are contiguous.
    wqkv_h = w_qkv.reshape(C, 3, num_heads, D)
    wqkv_h = jnp.transpose(wqkv_h, (2, 0, 1, 3)).reshape(num_heads, C, 3 * D)

    # proj input features are ordered (H, D) — matches transpose(1,2).reshape.
    wproj_h = w_proj.reshape(num_heads, D, C)

    return {
        "wqkv_h": wqkv_h,
        "wproj_h": wproj_h,
        "b_proj": b_proj.reshape(1, C),
    }


# ----------------------------------------------------------------------------
# Full Attention module forward (single fused pallas_call)
# ----------------------------------------------------------------------------
def attention_forward(x, prepared, num_heads):
    """x: (B, N, C) float32. Mirrors PyTorch Attention.forward (eval mode)."""
    B, N, C = x.shape
    D = C // num_heads
    scale = D ** (-0.5)

    kern = functools.partial(_attention_kernel, scale=scale)
    return pl.pallas_call(
        kern,
        out_shape=jax.ShapeDtypeStruct((B, N, C), x.dtype),
        grid_spec=pltpu.PrefetchScalarGridSpec(
            num_scalar_prefetch=0,
            grid=(B,),
            in_specs=[
                pl.BlockSpec((1, N, C), lambda b: (b, 0, 0)),            # x
                pl.BlockSpec((num_heads, C, 3 * D), lambda b: (0, 0, 0)),  # wqkv
                pl.BlockSpec((num_heads, D, C), lambda b: (0, 0, 0)),    # wproj
                pl.BlockSpec((1, C), lambda b: (0, 0)),                  # bproj
            ],
            out_specs=pl.BlockSpec((1, N, C), lambda b: (b, 0, 0)),
        ),
        compiler_params=pltpu.CompilerParams(
            dimension_semantics=("parallel",)),
    )(x, prepared["wqkv_h"], prepared["wproj_h"], prepared["b_proj"])


# ----------------------------------------------------------------------------
# Pure-JAX reference (mirrors the PyTorch module, qkv_bias=False, eval mode)
# ----------------------------------------------------------------------------
def attention_reference(x, params, num_heads):
    B, N, C = x.shape
    head_dim = C // num_heads
    scale = head_dim ** (-0.5)
    qkv = x @ params["w_qkv"]                                  # no qkv bias
    qkv = qkv.reshape(B, N, 3, num_heads, head_dim)
    qkv = jnp.transpose(qkv, (2, 0, 3, 1, 4))
    q, k, v = qkv[0], qkv[1], qkv[2]
    attn = jnp.einsum("bhnd,bhmd->bhnm", q, k) * scale
    attn = jax.nn.softmax(attn, axis=-1)
    o = jnp.einsum("bhnm,bhmd->bhnd", attn, v)
    o = jnp.transpose(o, (0, 2, 1, 3)).reshape(B, N, C)
    return o @ params["w_proj"] + params["b_proj"]


if __name__ == "__main__":
    # Small shapes consistent with the module: dim=32, num_heads=8, seq=8, batch=2
    B, N, C = 2, 8, 32
    num_heads = 8

    key = jax.random.PRNGKey(0)
    kx, kqkv, kproj, kpb = jax.random.split(key, 4)

    x = jax.random.normal(kx, (B, N, C), dtype=jnp.float32)

    params = {
        # stored as (in_features, out_features), i.e. PyTorch weight transposed
        "w_qkv": jax.random.normal(kqkv, (C, 3 * C), dtype=jnp.float32) * 0.05,
        "w_proj": jax.random.normal(kproj, (C, C), dtype=jnp.float32) * 0.05,
        "b_proj": jax.random.normal(kpb, (C,), dtype=jnp.float32) * 0.05,
    }

    prepared = prepare_params(params, num_heads)

    out = attention_forward(x, prepared, num_heads)
    out = jax.block_until_ready(out)

    ref = attention_reference(x, params, num_heads)
    assert out.shape == (B, N, C)
    # approx=True reciprocal in the softmax changes low-order bits only.
    assert jnp.allclose(out, ref, atol=1e-3, rtol=1e-3), "mismatch vs reference"

    print("KERNEL_OK")
</pallas_src>

<mosaic_0001>
module attributes {stable_mosaic.version = 11 : i64} {
  func.func @_attention_kernel(%arg0: i32, %arg1: memref<1x8x32xf32, #tpu.memory_space<vmem>>, %arg2: memref<8x32x12xf32, #tpu.memory_space<vmem>>, %arg3: memref<8x4x32xf32, #tpu.memory_space<vmem>>, %arg4: memref<1x32xf32, #tpu.memory_space<vmem>>, %arg5: memref<1x8x32xf32, #tpu.memory_space<vmem>>) attributes {dimension_semantics = [#tpu.dimension_semantics<parallel>], iteration_bounds = array<i64: 2>, scalar_prefetch = 0 : i64, scratch_operands = 0 : i64, tpu.core_type = #tpu.core_type<tc>, window_params = [{transform_indices = @transform_0, window_bounds = array<i64: 1, 8, 32>}, {pipeline_mode = #tpu.pipeline_mode<synchronous>, transform_indices = @transform_1, window_bounds = array<i64: 8, 32, 12>}, {pipeline_mode = #tpu.pipeline_mode<synchronous>, transform_indices = @transform_2, window_bounds = array<i64: 8, 4, 32>}, {pipeline_mode = #tpu.pipeline_mode<synchronous>, transform_indices = @transform_3, window_bounds = array<i64: 1, 32>}, {transform_indices = @transform_4, window_bounds = array<i64: 1, 8, 32>}]} {
    %c0 = arith.constant 0 : index
    %c0_0 = arith.constant 0 : index
    %c0_1 = arith.constant 0 : index
    %0 = vector.load %arg1[%c0, %c0_0, %c0_1] : memref<1x8x32xf32, #tpu.memory_space<vmem>>, vector<1x8x32xf32>
    %1 = vector.shape_cast %0 : vector<1x8x32xf32> to vector<8x32xf32>
    %2 = vector.shape_cast %1 : vector<8x32xf32> to vector<1x8x32xf32>
    %3 = vector.shape_cast %2 : vector<1x8x32xf32> to vector<1x8x32xf32>
    %4 = vector.broadcast %3 : vector<1x8x32xf32> to vector<8x8x32xf32>
    %c0_2 = arith.constant 0 : index
    %c0_3 = arith.constant 0 : index
    %c0_4 = arith.constant 0 : index
    %5 = vector.load %arg2[%c0_2, %c0_3, %c0_4] : memref<8x32x12xf32, #tpu.memory_space<vmem>>, vector<8x32x12xf32>
    "tpu.trace_start"() <{level = 10 : i32, message = "hnc,hce->hne"}> : () -> ()
    %cst = arith.constant dense<0.000000e+00> : vector<8x8x12xf32>
    %6 = tpu.matmul %4, %5, %cst {dimension_numbers = #tpu.dot_dimension_numbers<[2], [1], [1], [2], [0, 0, 0, 1, 1, 2], [0], [0]>} : vector<8x8x32xf32>, vector<8x32x12xf32>, vector<8x8x12xf32> -> vector<8x8x12xf32>
    "tpu.trace_stop"() : () -> ()
    %7 = vector.extract_strided_slice %6 {offsets = [0, 0, 0], sizes = [8, 8, 4], strides = [1, 1, 1]} : vector<8x8x12xf32> to vector<8x8x4xf32>
    %cst_5 = arith.constant 5.000000e-01 : f32
    %8 = vector.broadcast %cst_5 : f32 to vector<8x8x4xf32>
    %9 = arith.mulf %7, %8 : vector<8x8x4xf32>
    %10 = vector.extract_strided_slice %6 {offsets = [0, 0, 4], sizes = [8, 8, 4], strides = [1, 1, 1]} : vector<8x8x12xf32> to vector<8x8x4xf32>
    %11 = vector.extract_strided_slice %6 {offsets = [0, 0, 8], sizes = [8, 8, 4], strides = [1, 1, 1]} : vector<8x8x12xf32> to vector<8x8x4xf32>
    "tpu.trace_start"() <{level = 10 : i32, message = "hnd,hmd->hnm"}> : () -> ()
    %cst_6 = arith.constant dense<0.000000e+00> : vector<8x8x8xf32>
    %12 = tpu.matmul %9, %10, %cst_6 {dimension_numbers = #tpu.dot_dimension_numbers<[2], [2], [1], [1], [0, 0, 0, 1, 1, 1], [0], [0]>} : vector<8x8x4xf32>, vector<8x8x4xf32>, vector<8x8x8xf32> -> vector<8x8x8xf32>
    "tpu.trace_stop"() : () -> ()
    %cst_7 = arith.constant dense<0xFF800000> : vector<8x8xf32>
    %13 = vector.multi_reduction <maximumf>, %12, %cst_7 [2] : vector<8x8x8xf32> to vector<8x8xf32>
    %14 = vector.shape_cast %13 : vector<8x8xf32> to vector<8x8x1xf32>
    %15 = vector.broadcast %14 : vector<8x8x1xf32> to vector<8x8x8xf32>
    %16 = arith.subf %12, %15 : vector<8x8x8xf32>
    %17 = math.exp %16 : vector<8x8x8xf32>
    %cst_8 = arith.constant dense<0.000000e+00> : vector<8x8xf32>
    %18 = vector.multi_reduction <add>, %17, %cst_8 [2] : vector<8x8x8xf32> to vector<8x8xf32>
    %19 = vector.shape_cast %18 : vector<8x8xf32> to vector<8x8x1xf32>
    %20 = tpu.reciprocal %19 {approx = true} : vector<8x8x1xf32> -> vector<8x8x1xf32>
    %21 = vector.broadcast %20 : vector<8x8x1xf32> to vector<8x8x8xf32>
    %22 = arith.mulf %17, %21 : vector<8x8x8xf32>
    "tpu.trace_start"() <{level = 10 : i32, message = "hnm,hmd->hnd"}> : () -> ()
    %cst_9 = arith.constant dense<0.000000e+00> : vector<8x8x4xf32>
    %23 = tpu.matmul %22, %11, %cst_9 {dimension_numbers = #tpu.dot_dimension_numbers<[2], [1], [1], [2], [0, 0, 0, 1, 1, 2], [0], [0]>} : vector<8x8x8xf32>, vector<8x8x4xf32>, vector<8x8x4xf32> -> vector<8x8x4xf32>
    "tpu.trace_stop"() : () -> ()
    %c0_10 = arith.constant 0 : index
    %c0_11 = arith.constant 0 : index
    %c0_12 = arith.constant 0 : index
    %24 = vector.load %arg3[%c0_10, %c0_11, %c0_12] : memref<8x4x32xf32, #tpu.memory_space<vmem>>, vector<8x4x32xf32>
    "tpu.trace_start"() <{level = 10 : i32, message = "hnd,hdc->hnc"}> : () -> ()
    %cst_13 = arith.constant dense<0.000000e+00> : vector<8x8x32xf32>
    %25 = tpu.matmul %23, %24, %cst_13 {dimension_numbers = #tpu.dot_dimension_numbers<[2], [1], [1], [2], [0, 0, 0, 1, 1, 2], [0], [0]>} : vector<8x8x4xf32>, vector<8x4x32xf32>, vector<8x8x32xf32> -> vector<8x8x32xf32>
    "tpu.trace_stop"() : () -> ()
    %cst_14 = arith.constant dense<0.000000e+00> : vector<8x32xf32>
    %26 = vector.multi_reduction <add>, %25, %cst_14 [0] : vector<8x8x32xf32> to vector<8x32xf32>
    %c0_15 = arith.constant 0 : index
    %c0_16 = arith.constant 0 : index
    %27 = vector.load %arg4[%c0_15, %c0_16] : memref<1x32xf32, #tpu.memory_space<vmem>>, vector<1x32xf32>
    %28 = vector.broadcast %27 : vector<1x32xf32> to vector<8x32xf32>
    %29 = arith.addf %26, %28 : vector<8x32xf32>
    %c0_17 = arith.constant 0 : index
    %c0_18 = arith.constant 0 : index
    %c0_19 = arith.constant 0 : index
    %30 = vector.load %arg5[%c0_17, %c0_18, %c0_19] : memref<1x8x32xf32, #tpu.memory_space<vmem>>, vector<1x8x32xf32>
    %31 = vector.shape_cast %30 : vector<1x8x32xf32> to vector<8x32xf32>
    %32 = vector.shape_cast %29 : vector<8x32xf32> to vector<1x8x32xf32>
    tpu.vector_store %arg5[%c0_17, %c0_18, %c0_19], %32 {strides = array<i32>} : memref<1x8x32xf32, #tpu.memory_space<vmem>>, vector<1x8x32xf32>,
    return
  }
  func.func @transform_0(%arg0: i32) -> (i32, i32, i32) {
    %c0_i32 = arith.constant 0 : i32
    %c0_i32_0 = arith.constant 0 : i32
    %c0_i32_1 = arith.constant 0 : i32
    return %arg0, %c0_i32, %c0_i32_0 : i32, i32, i32
  }
  func.func @transform_1(%arg0: i32) -> (i32, i32, i32) {
    %c0_i32 = arith.constant 0 : i32
    %c0_i32_0 = arith.constant 0 : i32
    %c0_i32_1 = arith.constant 0 : i32
    %c0_i32_2 = arith.constant 0 : i32
    return %c0_i32, %c0_i32_0, %c0_i32_1 : i32, i32, i32
  }
  func.func @transform_2(%arg0: i32) -> (i32, i32, i32) {
    %c0_i32 = arith.constant 0 : i32
    %c0_i32_0 = arith.constant 0 : i32
    %c0_i32_1 = arith.constant 0 : i32
    %c0_i32_2 = arith.constant 0 : i32
    return %c0_i32, %c0_i32_0, %c0_i32_1 : i32, i32, i32
  }
  func.func @transform_3(%arg0: i32) -> (i32, i32) {
    %c0_i32 = arith.constant 0 : i32
    %c0_i32_0 = arith.constant 0 : i32
    %c0_i32_1 = arith.constant 0 : i32
    return %c0_i32, %c0_i32_0 : i32, i32
  }
  func.func @transform_4(%arg0: i32) -> (i32, i32, i32) {
    %c0_i32 = arith.constant 0 : i32
    %c0_i32_0 = arith.constant 0 : i32
    %c0_i32_1 = arith.constant 0 : i32
    return %arg0, %c0_i32, %c0_i32_0 : i32, i32, i32
  }
}

</mosaic_0001>

<llo_original>
// kernel: tpu_custom_call.1
$region0: #{tpu_custom_call.1}
  #allocation0 [shape = 'u32[]', space=smem, size = 0x4, offset = 0x4, fixed_abs, tag = 'smem constant byte address 0x4 - core index']
  #allocation1 [shape = 'u32[144,128]{1,0:T(1,128)}', space=vmem, size = 0x12000, scoped, tag = 'internal scratch']
  %s0 = inlined_call_operand.vmem [shape: f32[2,8,32], index: 0, kind: input, shape index: {}]
  %s1 = inlined_call_operand.vmem [shape: f32[8,32,12], index: 1, kind: input, shape index: {}]
  %s2 = inlined_call_operand.vmem [shape: f32[8,4,32], index: 2, kind: input, shape index: {}]
  %s3 = inlined_call_operand.vmem [shape: f32[1,32], index: 3, kind: input, shape index: {}]
  %s4 = inlined_call_operand.hbm [shape: f32[2,8,32], index: 4, kind: output, shape index: {}]
  %s5 = sld [smem:[#allocation0]]
  $region49: #{tpu_custom_call.1} parent=0
    _
  %s7 = ssub.s32 1, %s5
  %s8 = scalar_select 0, %s7, %s5
  $region1: #{tpu_custom_call.1} parent=0
    #allocation2 [shape = 'u8[8192]{0}', space=vmem, size = 0x2000, scoped, tag = 'output window, operand 0']
    #allocation3 [shape = 's32[2]{0}', space=sflag, size = 0x8, scoped, tag = 'scoped memory for tpu_custom_call.1']
    %9 = vsyncpa [#allocation3], 0
    %s10 = scalar_lea.sflag [#allocation3], 1
    %11 = vsyncpa %s10, 0
    loop: start=0, step=1, limit=4
    $region2: #{tpu_custom_call.1} parent=1 // loop_pre_header
      _
    $region3: #{tpu_custom_call.1} parent=1 // loop_header
      %s13 = sphi 0, %s17
      %p14 = scmp.ge.s32.totalorder %s13, 4
      %s23 = sphi 0, %s25
      %s26 = sphi 0, %s23
      %s27 = sphi 0, %s26
      %s43 = sphi 0, %s27
      %s47 = sphi 0, %s47
      %s49 = sphi 0, %s47
      %s50 = sphi 0, %s49
      %s64 = sphi 0, %s50
      %s68 = sphi 0, %s68
      %s70 = sphi 0, %s68
      %s71 = sphi 0, %s70
      %s85 = sphi 0, %s71
      %s89 = sphi 0, %s89
      %s91 = sphi 0, %s89
      %s92 = sphi 0, %s91
      %s106 = sphi 0, %s92
      %s112 = sphi 0, %s114
      %s115 = sphi 0, %s112
      %s116 = sphi 0, %s115
      %s132 = sphi 0, %s116
    $region4: #{tpu_custom_call.1} parent=1 // loop_header_branch
      %16 = sbr.rel (%p14) target = $region8
    $region5: #{tpu_custom_call.1} parent=1 // loop_body
      %s18 = ssub.s32 %s13, 1
      %s19 = ssub.s32 %s13, 2
      %s20 = sadd.s32 %s13, 1
      %s21 = ssub.s32 %s13, %s20
      %p22 = scmp.eq.s32.totalorder %s21, 0
      %s24 = sadd.s32 %s23, 1
      %s25 = scalar_select %p22, %s23, %s24
      %p28 = pneg %p22
      %p29 = scmp.eq.s32.totalorder %s13, 1
      %p30 = por %p28, %p29
      %p31 = scmp.ne.s32.totalorder %s23, %s26
      %p32 = scmp.eq.s32.totalorder %s13, 0
      %p33 = por %p31, %p32
      %p34 = scmp.ne.s32.totalorder %s23, %s26
      %p35 = scmp.eq.s32.totalorder %s18, 1
      %p36 = por %p34, %p35
      %p37 = scmp.ne.s32.totalorder %s26, %s27
      %p38 = scmp.eq.s32.totalorder %s18, 0
      %p39 = por %p37, %p38
      %p40 = scmp.ne.s32.totalorder %s26, %s27
      %p41 = scmp.eq.s32.totalorder %s19, 1
      %p42 = por %p40, %p41
      %p44 = scmp.ne.s32.totalorder %s27, %s43
      %p45 = scmp.eq.s32.totalorder %s19, 0
      %p46 = por %p44, %p45
      %s48 = sadd.s32 %s47, 1
      %p51 = scmp.eq.s32.totalorder %s13, 1
      %p52 = scmp.ne.s32.totalorder %s47, %s49
      %p53 = scmp.eq.s32.totalorder %s13, 0
      %p54 = por %p52, %p53
      %p55 = scmp.ne.s32.totalorder %s47, %s49
      %p56 = scmp.eq.s32.totalorder %s18, 1
      %p57 = por %p55, %p56
      %p58 = scmp.ne.s32.totalorder %s49, %s50
      %p59 = scmp.eq.s32.totalorder %s18, 0
      %p60 = por %p58, %p59
      %p61 = scmp.ne.s32.totalorder %s49, %s50
      %p62 = scmp.eq.s32.totalorder %s19, 1
      %p63 = por %p61, %p62
      %p65 = scmp.ne.s32.totalorder %s50, %s64
      %p66 = scmp.eq.s32.totalorder %s19, 0
      %p67 = por %p65, %p66
      %s69 = sadd.s32 %s68, 1
      %p72 = scmp.eq.s32.totalorder %s13, 1
      %p73 = scmp.ne.s32.totalorder %s68, %s70
      %p74 = scmp.eq.s32.totalorder %s13, 0
      %p75 = por %p73, %p74
      %p76 = scmp.ne.s32.totalorder %s68, %s70
      %p77 = scmp.eq.s32.totalorder %s18, 1
      %p78 = por %p76, %p77
      %p79 = scmp.ne.s32.totalorder %s70, %s71
      %p80 = scmp.eq.s32.totalorder %s18, 0
      %p81 = por %p79, %p80
      %p82 = scmp.ne.s32.totalorder %s70, %s71
      %p83 = scmp.eq.s32.totalorder %s19, 1
      %p84 = por %p82, %p83
      %p86 = scmp.ne.s32.totalorder %s71, %s85
      %p87 = scmp.eq.s32.totalorder %s19, 0
      %p88 = por %p86, %p87
      %s90 = sadd.s32 %s89, 1
      %p93 = scmp.eq.s32.totalorder %s13, 1
      %p94 = scmp.ne.s32.totalorder %s89, %s91
      %p95 = scmp.eq.s32.totalorder %s13, 0
      %p96 = por %p94, %p95
      %p97 = scmp.ne.s32.totalorder %s89, %s91
      %p98 = scmp.eq.s32.totalorder %s18, 1
      %p99 = por %p97, %p98
      %p100 = scmp.ne.s32.totalorder %s91, %s92
      %p101 = scmp.eq.s32.totalorder %s18, 0
      %p102 = por %p100, %p101
      %p103 = scmp.ne.s32.totalorder %s91, %s92
      %p104 = scmp.eq.s32.totalorder %s19, 1
      %p105 = por %p103, %p104
      %p107 = scmp.ne.s32.totalorder %s92, %s106
      %p108 = scmp.eq.s32.totalorder %s19, 0
      %p109 = por %p107, %p108
      %s110 = ssub.s32 %s13, %s20
      %p111 = scmp.eq.s32.totalorder %s110, 0
      %s113 = sadd.s32 %s112, 1
      %s114 = scalar_select %p111, %s112, %s113
      %p117 = pneg %p111
      %p118 = scmp.eq.s32.totalorder %s13, 1
      %p119 = por %p117, %p118
      %p120 = scmp.ne.s32.totalorder %s112, %s115
      %p121 = scmp.eq.s32.totalorder %s13, 0
      %p122 = por %p120, %p121
      %p123 = scmp.ne.s32.totalorder %s112, %s115
      %p124 = scmp.eq.s32.totalorder %s18, 1
      %p125 = por %p123, %p124
      %p126 = scmp.ne.s32.totalorder %s115, %s116
      %p127 = scmp.eq.s32.totalorder %s18, 0
      %p128 = por %p126, %p127
      %p129 = scmp.ne.s32.totalorder %s115, %s116
      %p130 = scmp.eq.s32.totalorder %s19, 1
      %p131 = por %p129, %p130
      %p133 = scmp.ne.s32.totalorder %s116, %s132
      %p134 = scmp.eq.s32.totalorder %s19, 0
      %p135 = por %p133, %p134
      %p136 = scmp.le.s32.totalorder 1, %s13
      %p137 = scmp.lt.s32.totalorder %s13, 3
      %p138 = pnand %p136, %p137
      %p139 = pneg %p138
      // Predicated region
      $region9: #{tpu_custom_call.1} parent=5 // pred_check
        _
      $region10: #{tpu_custom_call.1} parent=5 // pred_check_branch
        %141 = sbr.rel (%p138) target = $region12
      $region11: #{tpu_custom_call.1} parent=5 // pred_region
        %s142 = ssub.s32 %s13, 1
        // Predicated region
        $region13: #{tpu_custom_call.1} parent=11 // pred_check
          %p143 = pneg %p60
        $region14: #{tpu_custom_call.1} parent=11 // pred_check_branch
          %145 = sbr.rel (%p143) target = $region16
        $region15: #{tpu_custom_call.1} parent=11 // pred_region
          _
        $region16: #{tpu_custom_call.1} parent=11 // pred_fallthru
          _
        // Predicated region
        $region17: #{tpu_custom_call.1} parent=11 // pred_check
          %p146 = pneg %p81
        $region18: #{tpu_custom_call.1} parent=11 // pred_check_branch
          %148 = sbr.rel (%p146) target = $region20
        $region19: #{tpu_custom_call.1} parent=11 // pred_region
          _
        $region20: #{tpu_custom_call.1} parent=11 // pred_fallthru
          _
        // Predicated region
        $region21: #{tpu_custom_call.1} parent=11 // pred_check
          %p149 = pneg %p102
        $region22: #{tpu_custom_call.1} parent=11 // pred_check_branch
          %151 = sbr.rel (%p149) target = $region24
        $region23: #{tpu_custom_call.1} parent=11 // pred_region
          _
        $region24: #{tpu_custom_call.1} parent=11 // pred_fallthru
          _
      $region12: #{tpu_custom_call.1} parent=5 // pred_fallthru
        _
      %p152 = scmp.lt.s32.totalorder %s13, 2
      // Predicated region
      $region25: #{tpu_custom_call.1} parent=5 // pred_check
        %p153 = pneg %p152
      $region26: #{tpu_custom_call.1} parent=5 // pred_check_branch
        %155 = sbr.rel (%p153) target = $region28
      $region27: #{tpu_custom_call.1} parent=5 // pred_region
        // Predicated region
        $region29: #{tpu_custom_call.1} parent=27 // pred_check
          %p156 = pneg %p33
        $region30: #{tpu_custom_call.1} parent=27 // pred_check_branch
          %158 = sbr.rel (%p156) target = $region32
        $region31: #{tpu_custom_call.1} parent=27 // pred_region
          %p159 = scmp.lt.s32.totalorder %s13, 1
          %s160 = scalar_select %p159, %s13, 1
          %s161 = smul.addr %s160, 8
          %s162 = scalar_lea.vmem %s0, %s161
        $region32: #{tpu_custom_call.1} parent=27 // pred_fallthru
          _
      $region28: #{tpu_custom_call.1} parent=5 // pred_fallthru
        _
      %p163 = scmp.le.s32.totalorder 1, %s13
      %p164 = scmp.lt.s32.totalorder %s13, 3
      %p165 = pnand %p163, %p164
      %p166 = pneg %p165
      // Predicated region
      $region33: #{tpu_custom_call.1} parent=5 // pred_check
        _
      $region34: #{tpu_custom_call.1} parent=5 // pred_check_branch
        %168 = sbr.rel (%p165) target = $region36
      $region35: #{tpu_custom_call.1} parent=5 // pred_region
        %s169 = ssub.s32 %s13, 1
        %p170 = scmp.lt.s32.totalorder %s18, 1
        %s171 = scalar_select %p170, %s18, 1
        %s172 = smul.addr %s171, 8
        %s173 = scalar_lea.vmem %s0, %s172
        %p174 = pneg %p39
        %p175 = pneg %p36
        %p176 = pneg %p60
        %p177 = pneg %p57
        %p178 = pneg %p81
        %p179 = pneg %p78
        %p180 = pneg %p102
        %p181 = pneg %p99
        %p182 = pneg %p128
        %p183 = pneg %p125
        %s184 = sand.u32 %s115, 1
        %s185 = scalar_lea.sflag [#allocation3], %s184
        %s186 = sand.u32 %s115, 1
        %s187 = smul.addr %s186, 8
        %s188 = scalar_lea.vmem [#allocation2], %s187
        %p189 = scmp.lt.s32.totalorder %s18, 1
        %s190 = scalar_select %p189, %s18, 1
        %s191 = smul.addr %s190, 8
        %s192 = scalar_lea.vmem %s0, %s191
        %v193 = vld [vmem:[%s192] sm:$0xff]
        %v194 = vld [vmem:[%s1] sm:$0xff]
        %v195 = vld [vmem:[%s1 + $0x8] sm:$0xff]
        %v196 = vld [vmem:[%s1 + $0x10] sm:$0xff]
        %v197 = vld [vmem:[%s1 + $0x18] sm:$0xff]
        %v198 = vld [vmem:[%s1 + $0x20] sm:$0xff]
        %v199 = vld [vmem:[%s1 + $0x28] sm:$0xff]
        %v200 = vld [vmem:[%s1 + $0x30] sm:$0xff]
        %v201 = vld [vmem:[%s1 + $0x38] sm:$0xff]
        %v202 = vld [vmem:[%s1 + $0x40] sm:$0xff]
        %v203 = vld [vmem:[%s1 + $0x48] sm:$0xff]
        %v204 = vld [vmem:[%s1 + $0x50] sm:$0xff]
        %v205 = vld [vmem:[%s1 + $0x58] sm:$0xff]
        %v206 = vld [vmem:[%s1 + $0x60] sm:$0xff]
        %v207 = vld [vmem:[%s1 + $0x68] sm:$0xff]
        %v208 = vld [vmem:[%s1 + $0x70] sm:$0xff]
        %v209 = vld [vmem:[%s1 + $0x78] sm:$0xff]
        %v210 = vld [vmem:[%s1 + $0x80] sm:$0xff]
        %v211 = vld [vmem:[%s1 + $0x88] sm:$0xff]
        %v212 = vld [vmem:[%s1 + $0x90] sm:$0xff]
        %v213 = vld [vmem:[%s1 + $0x98] sm:$0xff]
        %v214 = vld [vmem:[%s1 + $0xa0] sm:$0xff]
        %v215 = vld [vmem:[%s1 + $0xa8] sm:$0xff]
        %v216 = vld [vmem:[%s1 + $0xb0] sm:$0xff]
        %v217 = vld [vmem:[%s1 + $0xb8] sm:$0xff]
        %v218 = vld [vmem:[%s1 + $0xc0] sm:$0xff]
        %v219 = vld [vmem:[%s1 + $0xc8] sm:$0xff]
        %v220 = vld [vmem:[%s1 + $0xd0] sm:$0xff]
        %v221 = vld [vmem:[%s1 + $0xd8] sm:$0xff]
        %v222 = vld [vmem:[%s1 + $0xe0] sm:$0xff]
        %v223 = vld [vmem:[%s1 + $0xe8] sm:$0xff]
        %v224 = vld [vmem:[%s1 + $0xf0] sm:$0xff]
        %v225 = vld [vmem:[%s1 + $0xf8] sm:$0xff]
        %vm226 = vcmask 261120
        %v228 = vsel %vm226, %v193, 0
        %230 = vmatprep.subr.mxu0 0.0
        %231 = vmatpush1.msra.mxu0 0.0
        %232 = vmatprep.subr.mxu0 0.0
        %233 = vmatpush1.msra.mxu0 0.0
        %234 = vmatprep.subr.mxu0 0.0
        %235 = vmatpush1.msra.mxu0 0.0
        %236 = vmatprep.subr.mxu0 0.0
        %237 = vmatpush1.msra.mxu0 0.0
        %238 = vmatprep.subr.mxu0 0.0
        %239 = vmatpush1.msra.mxu0 0.0
        %240 = vmatprep.subr.mxu0 0.0
        %241 = vmatpush1.msra.mxu0 0.0
        %242 = vmatprep.subr.mxu0 0.0
        %243 = vmatpush1.msra.mxu0 0.0
        %244 = vmatprep.subr.mxu0 0.0
        %245 = vmatpush1.msra.mxu0 0.0
        %246 = vmatprep.subr.mxu0 0.0
        %247 = vmatpush1.msra.mxu0 0.0
        %248 = vmatprep.subr.mxu0 0.0
        %249 = vmatpush1.msra.mxu0 0.0
        %250 = vmatprep.subr.mxu0 0.0
        %251 = vmatpush1.msra.mxu0 0.0
        %252 = vmatprep.subr.mxu0 0.0
        %253 = vmatpush1.msra.mxu0 0.0
        %254 = vmatprep.subr.mxu0 0.0
        %255 = vmatpush1.msra.mxu0 %v197
        %256 = vmatprep.subr.mxu0 0.0
        %257 = vmatpush1.msra.mxu0 %v196
        %258 = vmatprep.subr.mxu0 0.0
        %259 = vmatpush1.msra.mxu0 %v195
        %260 = vmatprep.subr.mxu0 0.0
        %261 = vmatpush1.msra.mxu0 %v194
        %262 = vmatprep.subr.mxu0 0.0
        %263 = vmatpush2.msra.mxu0 0.0
        %264 = vmatprep.subr.mxu0 0.0
        %265 = vmatpush2.msra.mxu0 0.0
        %266 = vmatprep.subr.mxu0 0.0
        %267 = vmatpush2.msra.mxu0 0.0
        %268 = vmatprep.subr.mxu0 0.0
        %269 = vmatpush2.msra.mxu0 0.0
        %270 = vmatprep.subr.mxu0 0.0
        %271 = vmatpush2.msra.mxu0 0.0
        %272 = vmatprep.subr.mxu0 0.0
        %273 = vmatpush2.msra.mxu0 0.0
        %274 = vmatprep.subr.mxu0 0.0
        %275 = vmatpush2.msra.mxu0 0.0
        %276 = vmatprep.subr.mxu0 0.0
        %277 = vmatpush2.msra.mxu0 0.0
        %278 = vmatprep.subr.mxu0 0.0
        %279 = vmatpush2.msra.mxu0 0.0
        %280 = vmatprep.subr.mxu0 0.0
        %281 = vmatpush2.msra.mxu0 0.0
        %282 = vmatprep.subr.mxu0 0.0
        %283 = vmatpush2.msra.mxu0 0.0
        %284 = vmatprep.subr.mxu0 0.0
        %285 = vmatpush2.msra.mxu0 0.0
        %286 = vmatprep.subr.mxu0 0.0
        %287 = vmatpush2.msra.mxu0 0.0
        %288 = vmatprep.subr.mxu0 0.0
        %289 = vmatpush2.msra.mxu0 0.0
        %290 = vmatprep.subr.mxu0 0.0
        %291 = vmatpush2.msra.mxu0 0.0
        %292 = vmatprep.subr.mxu0 0.0
        %293 = vmatpush2.msra.mxu0 0.0
        %294 = vmatprep.mubr.f32.mxu0 0.0
        %295 = vmatmul.mubr.f32.gmra.mxu0 %v228
        %v296 = vpop.f32.mrf.mxu0
        %v297 = vadd.f32 0.0, %v296
        %v298 = vpop.f32.mrf.mxu0
        %299 = vdwg.mxu0
        %300 = vmatprep.subr.mxu0 0.0
        %301 = vmatpush1.msra.mxu0 0.0
        %302 = vmatprep.subr.mxu0 0.0
        %303 = vmatpush1.msra.mxu0 0.0
        %304 = vmatprep.subr.mxu0 0.0
        %305 = vmatpush1.msra.mxu0 0.0
        %306 = vmatprep.subr.mxu0 0.0
        %307 = vmatpush1.msra.mxu0 0.0
        %308 = vmatprep.subr.mxu0 0.0
        %309 = vmatpush1.msra.mxu0 0.0
        %310 = vmatprep.subr.mxu0 0.0
        %311 = vmatpush1.msra.mxu0 0.0
        %312 = vmatprep.subr.mxu0 0.0
        %313 = vmatpush1.msra.mxu0 0.0
        %314 = vmatprep.subr.mxu0 0.0
        %315 = vmatpush1.msra.mxu0 0.0
        %316 = vmatprep.subr.mxu0 0.0
        %317 = vmatpush1.msra.mxu0 0.0
        %318 = vmatprep.subr.mxu0 0.0
        %319 = vmatpush1.msra.mxu0 0.0
        %320 = vmatprep.subr.mxu0 0.0
        %321 = vmatpush1.msra.mxu0 0.0
        %322 = vmatprep.subr.mxu0 0.0
        %323 = vmatpush1.msra.mxu0 0.0
        %324 = vmatprep.subr.mxu0 0.0
        %325 = vmatpush1.msra.mxu0 %v201
        %326 = vmatprep.subr.mxu0 0.0
        %327 = vmatpush1.msra.mxu0 %v200
        %328 = vmatprep.subr.mxu0 0.0
        %329 = vmatpush1.msra.mxu0 %v199
        %330 = vmatprep.subr.mxu0 0.0
        %331 = vmatpush1.msra.mxu0 %v198
        %332 = vmatprep.subr.mxu0 0.0
        %333 = vmatpush2.msra.mxu0 0.0
        %334 = vmatprep.subr.mxu0 0.0
        %335 = vmatpush2.msra.mxu0 0.0
        %336 = vmatprep.subr.mxu0 0.0
        %337 = vmatpush2.msra.mxu0 0.0
        %338 = vmatprep.subr.mxu0 0.0
        %339 = vmatpush2.msra.mxu0 0.0
        %340 = vmatprep.subr.mxu0 0.0
        %341 = vmatpush2.msra.mxu0 0.0
        %342 = vmatprep.subr.mxu0 0.0
        %343 = vmatpush2.msra.mxu0 0.0
        %344 = vmatprep.subr.mxu0 0.0
        %345 = vmatpush2.msra.mxu0 0.0
        %346 = vmatprep.subr.mxu0 0.0
        %347 = vmatpush2.msra.mxu0 0.0
        %348 = vmatprep.subr.mxu0 0.0
        %349 = vmatpush2.msra.mxu0 0.0
        %350 = vmatprep.subr.mxu0 0.0
        %351 = vmatpush2.msra.mxu0 0.0
        %352 = vmatprep.subr.mxu0 0.0
        %353 = vmatpush2.msra.mxu0 0.0
        %354 = vmatprep.subr.mxu0 0.0
        %355 = vmatpush2.msra.mxu0 0.0
        %356 = vmatprep.subr.mxu0 0.0
        %357 = vmatpush2.msra.mxu0 0.0
        %358 = vmatprep.subr.mxu0 0.0
        %359 = vmatpush2.msra.mxu0 0.0
        %360 = vmatprep.subr.mxu0 0.0
        %361 = vmatpush2.msra.mxu0 0.0
        %362 = vmatprep.subr.mxu0 0.0
        %363 = vmatpush2.msra.mxu0 0.0
        %364 = vmatprep.mubr.f32.mxu0 0.0
        %365 = vmatmul.mubr.f32.gmra.mxu0 %v228
        %v366 = vpop.f32.mrf.mxu0
        %v367 = vadd.f32 0.0, %v366
        %v368 = vpop.f32.mrf.mxu0
        %369 = vdwg.mxu0
        %370 = vmatprep.subr.mxu0 0.0
        %371 = vmatpush1.msra.mxu0 0.0
        %372 = vmatprep.subr.mxu0 0.0
        %373 = vmatpush1.msra.mxu0 0.0
        %374 = vmatprep.subr.mxu0 0.0
        %375 = vmatpush1.msra.mxu0 0.0
        %376 = vmatprep.subr.mxu0 0.0
        %377 = vmatpush1.msra.mxu0 0.0
        %378 = vmatprep.subr.mxu0 0.0
        %379 = vmatpush1.msra.mxu0 0.0
        %380 = vmatprep.subr.mxu0 0.0
        %381 = vmatpush1.msra.mxu0 0.0
        %382 = vmatprep.subr.mxu0 0.0
        %383 = vmatpush1.msra.mxu0 0.0
        %384 = vmatprep.subr.mxu0 0.0
        %385 = vmatpush1.msra.mxu0 0.0
        %386 = vmatprep.subr.mxu0 0.0
        %387 = vmatpush1.msra.mxu0 0.0
        %388 = vmatprep.subr.mxu0 0.0
        %389 = vmatpush1.msra.mxu0 0.0
        %390 = vmatprep.subr.mxu0 0.0
        %391 = vmatpush1.msra.mxu0 0.0
        %392 = vmatprep.subr.mxu0 0.0
        %393 = vmatpush1.msra.mxu0 0.0
        %394 = vmatprep.subr.mxu0 0.0
        %395 = vmatpush1.msra.mxu0 %v205
        %396 = vmatprep.subr.mxu0 0.0
        %397 = vmatpush1.msra.mxu0 %v204
        %398 = vmatprep.subr.mxu0 0.0
        %399 = vmatpush1.msra.mxu0 %v203
        %400 = vmatprep.subr.mxu0 0.0
        %401 = vmatpush1.msra.mxu0 %v202
        %402 = vmatprep.subr.mxu0 0.0
        %403 = vmatpush2.msra.mxu0 0.0
        %404 = vmatprep.subr.mxu0 0.0
        %405 = vmatpush2.msra.mxu0 0.0
        %406 = vmatprep.subr.mxu0 0.0
        %407 = vmatpush2.msra.mxu0 0.0
        %408 = vmatprep.subr.mxu0 0.0
        %409 = vmatpush2.msra.mxu0 0.0
        %410 = vmatprep.subr.mxu0 0.0
        %411 = vmatpush2.msra.mxu0 0.0
        %412 = vmatprep.subr.mxu0 0.0
        %413 = vmatpush2.msra.mxu0 0.0
        %414 = vmatprep.subr.mxu0 0.0
        %415 = vmatpush2.msra.mxu0 0.0
        %416 = vmatprep.subr.mxu0 0.0
        %417 = vmatpush2.msra.mxu0 0.0
        %418 = vmatprep.subr.mxu0 0.0
        %419 = vmatpush2.msra.mxu0 0.0
        %420 = vmatprep.subr.mxu0 0.0
        %421 = vmatpush2.msra.mxu0 0.0
        %422 = vmatprep.subr.mxu0 0.0
        %423 = vmatpush2.msra.mxu0 0.0
        %424 = vmatprep.subr.mxu0 0.0
        %425 = vmatpush2.msra.mxu0 0.0
        %426 = vmatprep.subr.mxu0 0.0
        %427 = vmatpush2.msra.mxu0 0.0
        %428 = vmatprep.subr.mxu0 0.0
        %429 = vmatpush2.msra.mxu0 0.0
        %430 = vmatprep.subr.mxu0 0.0
        %431 = vmatpush2.msra.mxu0 0.0
        %432 = vmatprep.subr.mxu0 0.0
        %433 = vmatpush2.msra.mxu0 0.0
        %434 = vmatprep.mubr.f32.mxu0 0.0
        %435 = vmatmul.mubr.f32.gmra.mxu0 %v228
        %v436 = vpop.f32.mrf.mxu0
        %v437 = vadd.f32 0.0, %v436
        %v438 = vpop.f32.mrf.mxu0
        %439 = vdwg.mxu0
        %440 = vmatprep.subr.mxu0 0.0
        %441 = vmatpush1.msra.mxu0 0.0
        %442 = vmatprep.subr.mxu0 0.0
        %443 = vmatpush1.msra.mxu0 0.0
        %444 = vmatprep.subr.mxu0 0.0
        %445 = vmatpush1.msra.mxu0 0.0
        %446 = vmatprep.subr.mxu0 0.0
        %447 = vmatpush1.msra.mxu0 0.0
        %448 = vmatprep.subr.mxu0 0.0
        %449 = vmatpush1.msra.mxu0 0.0
        %450 = vmatprep.subr.mxu0 0.0
        %451 = vmatpush1.msra.mxu0 0.0
        %452 = vmatprep.subr.mxu0 0.0
        %453 = vmatpush1.msra.mxu0 0.0
        %454 = vmatprep.subr.mxu0 0.0
        %455 = vmatpush1.msra.mxu0 0.0
        %456 = vmatprep.subr.mxu0 0.0
        %457 = vmatpush1.msra.mxu0 0.0
        %458 = vmatprep.subr.mxu0 0.0
        %459 = vmatpush1.msra.mxu0 0.0
        %460 = vmatprep.subr.mxu0 0.0
        %461 = vmatpush1.msra.mxu0 0.0
        %462 = vmatprep.subr.mxu0 0.0
        %463 = vmatpush1.msra.mxu0 0.0
        %464 = vmatprep.subr.mxu0 0.0
        %465 = vmatpush1.msra.mxu0 %v209
        %466 = vmatprep.subr.mxu0 0.0
        %467 = vmatpush1.msra.mxu0 %v208
        %468 = vmatprep.subr.mxu0 0.0
        %469 = vmatpush1.msra.mxu0 %v207
        %470 = vmatprep.subr.mxu0 0.0
        %471 = vmatpush1.msra.mxu0 %v206
        %472 = vmatprep.subr.mxu0 0.0
        %473 = vmatpush2.msra.mxu0 0.0
        %474 = vmatprep.subr.mxu0 0.0
        %475 = vmatpush2.msra.mxu0 0.0
        %476 = vmatprep.subr.mxu0 0.0
        %477 = vmatpush2.msra.mxu0 0.0
        %478 = vmatprep.subr.mxu0 0.0
        %479 = vmatpush2.msra.mxu0 0.0
        %480 = vmatprep.subr.mxu0 0.0
        %481 = vmatpush2.msra.mxu0 0.0
        %482 = vmatprep.subr.mxu0 0.0
        %483 = vmatpush2.msra.mxu0 0.0
        %484 = vmatprep.subr.mxu0 0.0
        %485 = vmatpush2.msra.mxu0 0.0
        %486 = vmatprep.subr.mxu0 0.0
        %487 = vmatpush2.msra.mxu0 0.0
        %488 = vmatprep.subr.mxu0 0.0
        %489 = vmatpush2.msra.mxu0 0.0
        %490 = vmatprep.subr.mxu0 0.0
        %491 = vmatpush2.msra.mxu0 0.0
        %492 = vmatprep.subr.mxu0 0.0
        %493 = vmatpush2.msra.mxu0 0.0
        %494 = vmatprep.subr.mxu0 0.0
        %495 = vmatpush2.msra.mxu0 0.0
        %496 = vmatprep.subr.mxu0 0.0
        %497 = vmatpush2.msra.mxu0 0.0
        %498 = vmatprep.subr.mxu0 0.0
        %499 = vmatpush2.msra.mxu0 0.0
        %500 = vmatprep.subr.mxu0 0.0
        %501 = vmatpush2.msra.mxu0 0.0
        %502 = vmatprep.subr.mxu0 0.0
        %503 = vmatpush2.msra.mxu0 0.0
        %504 = vmatprep.mubr.f32.mxu0 0.0
        %505 = vmatmul.mubr.f32.gmra.mxu0 %v228
        %v506 = vpop.f32.mrf.mxu0
        %v507 = vadd.f32 0.0, %v506
        %v508 = vpop.f32.mrf.mxu0
        %509 = vdwg.mxu0
        %510 = vmatprep.subr.mxu0 0.0
        %511 = vmatpush1.msra.mxu0 0.0
        %512 = vmatprep.subr.mxu0 0.0
        %513 = vmatpush1.msra.mxu0 0.0
        %514 = vmatprep.subr.mxu0 0.0
        %515 = vmatpush1.msra.mxu0 0.0
        %516 = vmatprep.subr.mxu0 0.0
        %517 = vmatpush1.msra.mxu0 0.0
        %518 = vmatprep.subr.mxu0 0.0
        %519 = vmatpush1.msra.mxu0 0.0
        %520 = vmatprep.subr.mxu0 0.0
        %521 = vmatpush1.msra.mxu0 0.0
        %522 = vmatprep.subr.mxu0 0.0
        %523 = vmatpush1.msra.mxu0 0.0
        %524 = vmatprep.subr.mxu0 0.0
        %525 = vmatpush1.msra.mxu0 0.0
        %526 = vmatprep.subr.mxu0 0.0
        %527 = vmatpush1.msra.mxu0 0.0
        %528 = vmatprep.subr.mxu0 0.0
        %529 = vmatpush1.msra.mxu0 0.0
        %530 = vmatprep.subr.mxu0 0.0
        %531 = vmatpush1.msra.mxu0 0.0
        %532 = vmatprep.subr.mxu0 0.0
        %533 = vmatpush1.msra.mxu0 0.0
        %534 = vmatprep.subr.mxu0 0.0
        %535 = vmatpush1.msra.mxu0 %v213
        %536 = vmatprep.subr.mxu0 0.0
        %537 = vmatpush1.msra.mxu0 %v212
        %538 = vmatprep.subr.mxu0 0.0
        %539 = vmatpush1.msra.mxu0 %v211
        %540 = vmatprep.subr.mxu0 0.0
        %541 = vmatpush1.msra.mxu0 %v210
        %542 = vmatprep.subr.mxu0 0.0
        %543 = vmatpush2.msra.mxu0 0.0
        %544 = vmatprep.subr.mxu0 0.0
        %545 = vmatpush2.msra.mxu0 0.0
        %546 = vmatprep.subr.mxu0 0.0
        %547 = vmatpush2.msra.mxu0 0.0
        %548 = vmatprep.subr.mxu0 0.0
        %549 = vmatpush2.msra.mxu0 0.0
        %550 = vmatprep.subr.mxu0 0.0
        %551 = vmatpush2.msra.mxu0 0.0
        %552 = vmatprep.subr.mxu0 0.0
        %553 = vmatpush2.msra.mxu0 0.0
        %554 = vmatprep.subr.mxu0 0.0
        %555 = vmatpush2.msra.mxu0 0.0
        %556 = vmatprep.subr.mxu0 0.0
        %557 = vmatpush2.msra.mxu0 0.0
        %558 = vmatprep.subr.mxu0 0.0
        %559 = vmatpush2.msra.mxu0 0.0
        %560 = vmatprep.subr.mxu0 0.0
        %561 = vmatpush2.msra.mxu0 0.0
        %562 = vmatprep.subr.mxu0 0.0
        %563 = vmatpush2.msra.mxu0 0.0
        %564 = vmatprep.subr.mxu0 0.0
        %565 = vmatpush2.msra.mxu0 0.0
        %566 = vmatprep.subr.mxu0 0.0
        %567 = vmatpush2.msra.mxu0 0.0
        %568 = vmatprep.subr.mxu0 0.0
        %569 = vmatpush2.msra.mxu0 0.0
        %570 = vmatprep.subr.mxu0 0.0
        %571 = vmatpush2.msra.mxu0 0.0
        %572 = vmatprep.subr.mxu0 0.0
        %573 = vmatpush2.msra.mxu0 0.0
        %574 = vmatprep.mubr.f32.mxu0 0.0
        %575 = vmatmul.mubr.f32.gmra.mxu0 %v228
        %v576 = vpop.f32.mrf.mxu0
        %v577 = vadd.f32 0.0, %v576
        %v578 = vpop.f32.mrf.mxu0
        %579 = vdwg.mxu0
        %580 = vmatprep.subr.mxu0 0.0
        %581 = vmatpush1.msra.mxu0 0.0
        %582 = vmatprep.subr.mxu0 0.0
        %583 = vmatpush1.msra.mxu0 0.0
        %584 = vmatprep.subr.mxu0 0.0
        %585 = vmatpush1.msra.mxu0 0.0
        %586 = vmatprep.subr.mxu0 0.0
        %587 = vmatpush1.msra.mxu0 0.0
        %588 = vmatprep.subr.mxu0 0.0
        %589 = vmatpush1.msra.mxu0 0.0
        %590 = vmatprep.subr.mxu0 0.0
        %591 = vmatpush1.msra.mxu0 0.0
        %592 = vmatprep.subr.mxu0 0.0
        %593 = vmatpush1.msra.mxu0 0.0
        %594 = vmatprep.subr.mxu0 0.0
        %595 = vmatpush1.msra.mxu0 0.0
        %596 = vmatprep.subr.mxu0 0.0
        %597 = vmatpush1.msra.mxu0 0.0
        %598 = vmatprep.subr.mxu0 0.0
        %599 = vmatpush1.msra.mxu0 0.0
        %600 = vmatprep.subr.mxu0 0.0
        %601 = vmatpush1.msra.mxu0 0.0
        %602 = vmatprep.subr.mxu0 0.0
        %603 = vmatpush1.msra.mxu0 0.0
        %604 = vmatprep.subr.mxu0 0.0
        %605 = vmatpush1.msra.mxu0 %v217
        %606 = vmatprep.subr.mxu0 0.0
        %607 = vmatpush1.msra.mxu0 %v216
        %608 = vmatprep.subr.mxu0 0.0
        %609 = vmatpush1.msra.mxu0 %v215
        %610 = vmatprep.subr.mxu0 0.0
        %611 = vmatpush1.msra.mxu0 %v214
        %612 = vmatprep.subr.mxu0 0.0
        %613 = vmatpush2.msra.mxu0 0.0
        %614 = vmatprep.subr.mxu0 0.0
        %615 = vmatpush2.msra.mxu0 0.0
        %616 = vmatprep.subr.mxu0 0.0
        %617 = vmatpush2.msra.mxu0 0.0
        %618 = vmatprep.subr.mxu0 0.0
        %619 = vmatpush2.msra.mxu0 0.0
        %620 = vmatprep.subr.mxu0 0.0
        %621 = vmatpush2.msra.mxu0 0.0
        %622 = vmatprep.subr.mxu0 0.0
        %623 = vmatpush2.msra.mxu0 0.0
        %624 = vmatprep.subr.mxu0 0.0
        %625 = vmatpush2.msra.mxu0 0.0
        %626 = vmatprep.subr.mxu0 0.0
        %627 = vmatpush2.msra.mxu0 0.0
        %628 = vmatprep.subr.mxu0 0.0
        %629 = vmatpush2.msra.mxu0 0.0
        %630 = vmatprep.subr.mxu0 0.0
        %631 = vmatpush2.msra.mxu0 0.0
        %632 = vmatprep.subr.mxu0 0.0
        %633 = vmatpush2.msra.mxu0 0.0
        %634 = vmatprep.subr.mxu0 0.0
        %635 = vmatpush2.msra.mxu0 0.0
        %636 = vmatprep.subr.mxu0 0.0
        %637 = vmatpush2.msra.mxu0 0.0
        %638 = vmatprep.subr.mxu0 0.0
        %639 = vmatpush2.msra.mxu0 0.0
        %640 = vmatprep.subr.mxu0 0.0
        %641 = vmatpush2.msra.mxu0 0.0
        %642 = vmatprep.subr.mxu0 0.0
        %643 = vmatpush2.msra.mxu0 0.0
        %644 = vmatprep.mubr.f32.mxu0 0.0
        %645 = vmatmul.mubr.f32.gmra.mxu0 %v228
        %v646 = vpop.f32.mrf.mxu0
        %v647 = vadd.f32 0.0, %v646
        %v648 = vpop.f32.mrf.mxu0
        %649 = vdwg.mxu0
        %650 = vmatprep.subr.mxu0 0.0
        %651 = vmatpush1.msra.mxu0 0.0
        %652 = vmatprep.subr.mxu0 0.0
        %653 = vmatpush1.msra.mxu0 0.0
        %654 = vmatprep.subr.mxu0 0.0
        %655 = vmatpush1.msra.mxu0 0.0
        %656 = vmatprep.subr.mxu0 0.0
        %657 = vmatpush1.msra.mxu0 0.0
        %658 = vmatprep.subr.mxu0 0.0
        %659 = vmatpush1.msra.mxu0 0.0
        %660 = vmatprep.subr.mxu0 0.0
        %661 = vmatpush1.msra.mxu0 0.0
        %662 = vmatprep.subr.mxu0 0.0
        %663 = vmatpush1.msra.mxu0 0.0
        %664 = vmatprep.subr.mxu0 0.0
        %665 = vmatpush1.msra.mxu0 0.0
        %666 = vmatprep.subr.mxu0 0.0
        %667 = vmatpush1.msra.mxu0 0.0
        %668 = vmatprep.subr.mxu0 0.0
        %669 = vmatpush1.msra.mxu0 0.0
        %670 = vmatprep.subr.mxu0 0.0
        %671 = vmatpush1.msra.mxu0 0.0
        %672 = vmatprep.subr.mxu0 0.0
        %673 = vmatpush1.msra.mxu0 0.0
        %674 = vmatprep.subr.mxu0 0.0
        %675 = vmatpush1.msra.mxu0 %v221
        %676 = vmatprep.subr.mxu0 0.0
        %677 = vmatpush1.msra.mxu0 %v220
        %678 = vmatprep.subr.mxu0 0.0
        %679 = vmatpush1.msra.mxu0 %v219
        %680 = vmatprep.subr.mxu0 0.0
        %681 = vmatpush1.msra.mxu0 %v218
        %682 = vmatprep.subr.mxu0 0.0
        %683 = vmatpush2.msra.mxu0 0.0
        %684 = vmatprep.subr.mxu0 0.0
        %685 = vmatpush2.msra.mxu0 0.0
        %686 = vmatprep.subr.mxu0 0.0
        %687 = vmatpush2.msra.mxu0 0.0
        %688 = vmatprep.subr.mxu0 0.0
        %689 = vmatpush2.msra.mxu0 0.0
        %690 = vmatprep.subr.mxu0 0.0
        %691 = vmatpush2.msra.mxu0 0.0
        %692 = vmatprep.subr.mxu0 0.0
        %693 = vmatpush2.msra.mxu0 0.0
        %694 = vmatprep.subr.mxu0 0.0
        %695 = vmatpush2.msra.mxu0 0.0
        %696 = vmatprep.subr.mxu0 0.0
        %697 = vmatpush2.msra.mxu0 0.0
        %698 = vmatprep.subr.mxu0 0.0
        %699 = vmatpush2.msra.mxu0 0.0
        %700 = vmatprep.subr.mxu0 0.0
        %701 = vmatpush2.msra.mxu0 0.0
        %702 = vmatprep.subr.mxu0 0.0
        %703 = vmatpush2.msra.mxu0 0.0
        %704 = vmatprep.subr.mxu0 0.0
        %705 = vmatpush2.msra.mxu0 0.0
        %706 = vmatprep.subr.mxu0 0.0
        %707 = vmatpush2.msra.mxu0 0.0
        %708 = vmatprep.subr.mxu0 0.0
        %709 = vmatpush2.msra.mxu0 0.0
        %710 = vmatprep.subr.mxu0 0.0
        %711 = vmatpush2.msra.mxu0 0.0
        %712 = vmatprep.subr.mxu0 0.0
        %713 = vmatpush2.msra.mxu0 0.0
        %714 = vmatprep.mubr.f32.mxu0 0.0
        %715 = vmatmul.mubr.f32.gmra.mxu0 %v228
        %v716 = vpop.f32.mrf.mxu0
        %v717 = vadd.f32 0.0, %v716
        %v718 = vpop.f32.mrf.mxu0
        %719 = vdwg.mxu0
        %720 = vmatprep.subr.mxu0 0.0
        %721 = vmatpush1.msra.mxu0 0.0
        %722 = vmatprep.subr.mxu0 0.0
        %723 = vmatpush1.msra.mxu0 0.0
        %724 = vmatprep.subr.mxu0 0.0
        %725 = vmatpush1.msra.mxu0 0.0
        %726 = vmatprep.subr.mxu0 0.0
        %727 = vmatpush1.msra.mxu0 0.0
        %728 = vmatprep.subr.mxu0 0.0
        %729 = vmatpush1.msra.mxu0 0.0
        %730 = vmatprep.subr.mxu0 0.0
        %731 = vmatpush1.msra.mxu0 0.0
        %732 = vmatprep.subr.mxu0 0.0
        %733 = vmatpush1.msra.mxu0 0.0
        %734 = vmatprep.subr.mxu0 0.0
        %735 = vmatpush1.msra.mxu0 0.0
        %736 = vmatprep.subr.mxu0 0.0
        %737 = vmatpush1.msra.mxu0 0.0
        %738 = vmatprep.subr.mxu0 0.0
        %739 = vmatpush1.msra.mxu0 0.0
        %740 = vmatprep.subr.mxu0 0.0
        %741 = vmatpush1.msra.mxu0 0.0
        %742 = vmatprep.subr.mxu0 0.0
        %743 = vmatpush1.msra.mxu0 0.0
        %744 = vmatprep.subr.mxu0 0.0
        %745 = vmatpush1.msra.mxu0 %v225
        %746 = vmatprep.subr.mxu0 0.0
        %747 = vmatpush1.msra.mxu0 %v224
        %748 = vmatprep.subr.mxu0 0.0
        %749 = vmatpush1.msra.mxu0 %v223
        %750 = vmatprep.subr.mxu0 0.0
        %751 = vmatpush1.msra.mxu0 %v222
        %752 = vmatprep.subr.mxu0 0.0
        %753 = vmatpush2.msra.mxu0 0.0
        %754 = vmatprep.subr.mxu0 0.0
        %755 = vmatpush2.msra.mxu0 0.0
        %756 = vmatprep.subr.mxu0 0.0
        %757 = vmatpush2.msra.mxu0 0.0
        %758 = vmatprep.subr.mxu0 0.0
        %759 = vmatpush2.msra.mxu0 0.0
        %760 = vmatprep.subr.mxu0 0.0
        %761 = vmatpush2.msra.mxu0 0.0
        %762 = vmatprep.subr.mxu0 0.0
        %763 = vmatpush2.msra.mxu0 0.0
        %764 = vmatprep.subr.mxu0 0.0
        %765 = vmatpush2.msra.mxu0 0.0
        %766 = vmatprep.subr.mxu0 0.0
        %767 = vmatpush2.msra.mxu0 0.0
        %768 = vmatprep.subr.mxu0 0.0
        %769 = vmatpush2.msra.mxu0 0.0
        %770 = vmatprep.subr.mxu0 0.0
        %771 = vmatpush2.msra.mxu0 0.0
        %772 = vmatprep.subr.mxu0 0.0
        %773 = vmatpush2.msra.mxu0 0.0
        %774 = vmatprep.subr.mxu0 0.0
        %775 = vmatpush2.msra.mxu0 0.0
        %776 = vmatprep.subr.mxu0 0.0
        %777 = vmatpush2.msra.mxu0 0.0
        %778 = vmatprep.subr.mxu0 0.0
        %779 = vmatpush2.msra.mxu0 0.0
        %780 = vmatprep.subr.mxu0 0.0
        %781 = vmatpush2.msra.mxu0 0.0
        %782 = vmatprep.subr.mxu0 0.0
        %783 = vmatpush2.msra.mxu0 0.0
        %784 = vmatprep.mubr.f32.mxu0 0.0
        %785 = vmatmul.mubr.f32.gmra.mxu0 %v228
        %v786 = vpop.f32.mrf.mxu0
        %v787 = vadd.f32 0.0, %v786
        %v788 = vpop.f32.mrf.mxu0
        %789 = vdwg.mxu0
        %v790 = vmul.f32 %v297, 0.5
        %v791 = vmul.f32 %v367, 0.5
        %v792 = vmul.f32 %v437, 0.5
        %v793 = vmul.f32 %v507, 0.5
        %v794 = vmul.f32 %v577, 0.5
        %v795 = vmul.f32 %v647, 0.5
        %v796 = vmul.f32 %v717, 0.5
        %v797 = vmul.f32 %v787, 0.5
        %799 = vrot.lane.b32.xlu0 %v297, 124
        %v800 = vpop.permute.xlu0 %799
        %vm801 = vcmask 31744
        %v803 = vsel %vm801, %v790, 0
        %v805 = vsel %vm801, %v800, 0
        %807 = vmatprep.subr.mxu0 0.0
        %808 = vmatpush1.xpose.msra.mxu0 0.0
        %809 = vmatprep.subr.mxu0 0.0
        %810 = vmatpush1.xpose.msra.mxu0 0.0
        %811 = vmatprep.subr.mxu0 0.0
        %812 = vmatpush1.xpose.msra.mxu0 0.0
        %813 = vmatprep.subr.mxu0 0.0
        %814 = vmatpush1.xpose.msra.mxu0 0.0
        %815 = vmatprep.subr.mxu0 0.0
        %816 = vmatpush1.xpose.msra.mxu0 0.0
        %817 = vmatprep.subr.mxu0 0.0
        %818 = vmatpush1.xpose.msra.mxu0 0.0
        %819 = vmatprep.subr.mxu0 0.0
        %820 = vmatpush1.xpose.msra.mxu0 0.0
        %821 = vmatprep.subr.mxu0 0.0
        %822 = vmatpush1.xpose.msra.mxu0 0.0
        %823 = vmatprep.subr.mxu0 0.0
        %824 = vmatpush1.xpose.msra.mxu0 0.0
        %825 = vmatprep.subr.mxu0 0.0
        %826 = vmatpush1.xpose.msra.mxu0 0.0
        %827 = vmatprep.subr.mxu0 0.0
        %828 = vmatpush1.xpose.msra.mxu0 0.0
        %829 = vmatprep.subr.mxu0 0.0
        %830 = vmatpush1.xpose.msra.mxu0 0.0
        %831 = vmatprep.subr.mxu0 0.0
        %832 = vmatpush1.xpose.msra.mxu0 0.0
        %833 = vmatprep.subr.mxu0 0.0
        %834 = vmatpush1.xpose.msra.mxu0 0.0
        %835 = vmatprep.subr.mxu0 0.0
        %836 = vmatpush1.xpose.msra.mxu0 0.0
        %837 = vmatprep.subr.mxu0 0.0
        %838 = vmatpush1.xpose.msra.mxu0 %v805
        %839 = vmatprep.subr.mxu0 0.0
        %840 = vmatpush2.xpose.msra.mxu0 0.0
        %841 = vmatprep.subr.mxu0 0.0
        %842 = vmatpush2.xpose.msra.mxu0 0.0
        %843 = vmatprep.subr.mxu0 0.0
        %844 = vmatpush2.xpose.msra.mxu0 0.0
        %845 = vmatprep.subr.mxu0 0.0
        %846 = vmatpush2.xpose.msra.mxu0 0.0
        %847 = vmatprep.subr.mxu0 0.0
        %848 = vmatpush2.xpose.msra.mxu0 0.0
        %849 = vmatprep.subr.mxu0 0.0
        %850 = vmatpush2.xpose.msra.mxu0 0.0
        %851 = vmatprep.subr.mxu0 0.0
        %852 = vmatpush2.xpose.msra.mxu0 0.0
        %853 = vmatprep.subr.mxu0 0.0
        %854 = vmatpush2.xpose.msra.mxu0 0.0
        %855 = vmatprep.subr.mxu0 0.0
        %856 = vmatpush2.xpose.msra.mxu0 0.0
        %857 = vmatprep.subr.mxu0 0.0
        %858 = vmatpush2.xpose.msra.mxu0 0.0
        %859 = vmatprep.subr.mxu0 0.0
        %860 = vmatpush2.xpose.msra.mxu0 0.0
        %861 = vmatprep.subr.mxu0 0.0
        %862 = vmatpush2.xpose.msra.mxu0 0.0
        %863 = vmatprep.subr.mxu0 0.0
        %864 = vmatpush2.xpose.msra.mxu0 0.0
        %865 = vmatprep.subr.mxu0 0.0
        %866 = vmatpush2.xpose.msra.mxu0 0.0
        %867 = vmatprep.subr.mxu0 0.0
        %868 = vmatpush2.xpose.msra.mxu0 0.0
        %869 = vmatprep.subr.mxu0 0.0
        %870 = vmatpush2.xpose.msra.mxu0 0.0
        %871 = vmatprep.mubr.f32.mxu0 0.0
        %872 = vmatmul.mubr.f32.gmra.mxu0 %v803
        %v873 = vpop.f32.mrf.mxu0
        %v874 = vadd.f32 0.0, %v873
        %v875 = vpop.f32.mrf.mxu0
        %876 = vdwg.mxu0
        %878 = vrot.lane.b32.xlu0 %v367, 124
        %v879 = vpop.permute.xlu0 %878
        %v881 = vsel %vm801, %v791, 0
        %v883 = vsel %vm801, %v879, 0
        %885 = vmatprep.subr.mxu0 0.0
        %886 = vmatpush1.xpose.msra.mxu0 0.0
        %887 = vmatprep.subr.mxu0 0.0
        %888 = vmatpush1.xpose.msra.mxu0 0.0
        %889 = vmatprep.subr.mxu0 0.0
        %890 = vmatpush1.xpose.msra.mxu0 0.0
        %891 = vmatprep.subr.mxu0 0.0
        %892 = vmatpush1.xpose.msra.mxu0 0.0
        %893 = vmatprep.subr.mxu0 0.0
        %894 = vmatpush1.xpose.msra.mxu0 0.0
        %895 = vmatprep.subr.mxu0 0.0
        %896 = vmatpush1.xpose.msra.mxu0 0.0
        %897 = vmatprep.subr.mxu0 0.0
        %898 = vmatpush1.xpose.msra.mxu0 0.0
        %899 = vmatprep.subr.mxu0 0.0
        %900 = vmatpush1.xpose.msra.mxu0 0.0
        %901 = vmatprep.subr.mxu0 0.0
        %902 = vmatpush1.xpose.msra.mxu0 0.0
        %903 = vmatprep.subr.mxu0 0.0
        %904 = vmatpush1.xpose.msra.mxu0 0.0
        %905 = vmatprep.subr.mxu0 0.0
        %906 = vmatpush1.xpose.msra.mxu0 0.0
        %907 = vmatprep.subr.mxu0 0.0
        %908 = vmatpush1.xpose.msra.mxu0 0.0
        %909 = vmatprep.subr.mxu0 0.0
        %910 = vmatpush1.xpose.msra.mxu0 0.0
        %911 = vmatprep.subr.mxu0 0.0
        %912 = vmatpush1.xpose.msra.mxu0 0.0
        %913 = vmatprep.subr.mxu0 0.0
        %914 = vmatpush1.xpose.msra.mxu0 0.0
        %915 = vmatprep.subr.mxu0 0.0
        %916 = vmatpush1.xpose.msra.mxu0 %v883
        %917 = vmatprep.subr.mxu0 0.0
        %918 = vmatpush2.xpose.msra.mxu0 0.0
        %919 = vmatprep.subr.mxu0 0.0
        %920 = vmatpush2.xpose.msra.mxu0 0.0
        %921 = vmatprep.subr.mxu0 0.0
        %922 = vmatpush2.xpose.msra.mxu0 0.0
        %923 = vmatprep.subr.mxu0 0.0
        %924 = vmatpush2.xpose.msra.mxu0 0.0
        %925 = vmatprep.subr.mxu0 0.0
        %926 = vmatpush2.xpose.msra.mxu0 0.0
        %927 = vmatprep.subr.mxu0 0.0
        %928 = vmatpush2.xpose.msra.mxu0 0.0
        %929 = vmatprep.subr.mxu0 0.0
        %930 = vmatpush2.xpose.msra.mxu0 0.0
        %931 = vmatprep.subr.mxu0 0.0
        %932 = vmatpush2.xpose.msra.mxu0 0.0
        %933 = vmatprep.subr.mxu0 0.0
        %934 = vmatpush2.xpose.msra.mxu0 0.0
        %935 = vmatprep.subr.mxu0 0.0
        %936 = vmatpush2.xpose.msra.mxu0 0.0
        %937 = vmatprep.subr.mxu0 0.0
        %938 = vmatpush2.xpose.msra.mxu0 0.0
        %939 = vmatprep.subr.mxu0 0.0
        %940 = vmatpush2.xpose.msra.mxu0 0.0
        %941 = vmatprep.subr.mxu0 0.0
        %942 = vmatpush2.xpose.msra.mxu0 0.0
        %943 = vmatprep.subr.mxu0 0.0
        %944 = vmatpush2.xpose.msra.mxu0 0.0
        %945 = vmatprep.subr.mxu0 0.0
        %946 = vmatpush2.xpose.msra.mxu0 0.0
        %947 = vmatprep.subr.mxu0 0.0
        %948 = vmatpush2.xpose.msra.mxu0 0.0
        %949 = vmatprep.mubr.f32.mxu0 0.0
        %950 = vmatmul.mubr.f32.gmra.mxu0 %v881
        %v951 = vpop.f32.mrf.mxu0
        %v952 = vadd.f32 0.0, %v951
        %v953 = vpop.f32.mrf.mxu0
        %954 = vdwg.mxu0
        %956 = vrot.lane.b32.xlu0 %v437, 124
        %v957 = vpop.permute.xlu0 %956
        %v959 = vsel %vm801, %v792, 0
        %v961 = vsel %vm801, %v957, 0
        %963 = vmatprep.subr.mxu0 0.0
        %964 = vmatpush1.xpose.msra.mxu0 0.0
        %965 = vmatprep.subr.mxu0 0.0
        %966 = vmatpush1.xpose.msra.mxu0 0.0
        %967 = vmatprep.subr.mxu0 0.0
        %968 = vmatpush1.xpose.msra.mxu0 0.0
        %969 = vmatprep.subr.mxu0 0.0
        %970 = vmatpush1.xpose.msra.mxu0 0.0
        %971 = vmatprep.subr.mxu0 0.0
        %972 = vmatpush1.xpose.msra.mxu0 0.0
        %973 = vmatprep.subr.mxu0 0.0
        %974 = vmatpush1.xpose.msra.mxu0 0.0
        %975 = vmatprep.subr.mxu0 0.0
        %976 = vmatpush1.xpose.msra.mxu0 0.0
        %977 = vmatprep.subr.mxu0 0.0
        %978 = vmatpush1.xpose.msra.mxu0 0.0
        %979 = vmatprep.subr.mxu0 0.0
        %980 = vmatpush1.xpose.msra.mxu0 0.0
        %981 = vmatprep.subr.mxu0 0.0
        %982 = vmatpush1.xpose.msra.mxu0 0.0
        %983 = vmatprep.subr.mxu0 0.0
        %984 = vmatpush1.xpose.msra.mxu0 0.0
        %985 = vmatprep.subr.mxu0 0.0
        %986 = vmatpush1.xpose.msra.mxu0 0.0
        %987 = vmatprep.subr.mxu0 0.0
        %988 = vmatpush1.xpose.msra.mxu0 0.0
        %989 = vmatprep.subr.mxu0 0.0
        %990 = vmatpush1.xpose.msra.mxu0 0.0
        %991 = vmatprep.subr.mxu0 0.0
        %992 = vmatpush1.xpose.msra.mxu0 0.0
        %993 = vmatprep.subr.mxu0 0.0
        %994 = vmatpush1.xpose.msra.mxu0 %v961
        %995 = vmatprep.subr.mxu0 0.0
        %996 = vmatpush2.xpose.msra.mxu0 0.0
        %997 = vmatprep.subr.mxu0 0.0
        %998 = vmatpush2.xpose.msra.mxu0 0.0
        %999 = vmatprep.subr.mxu0 0.0
        %1000 = vmatpush2.xpose.msra.mxu0 0.0
        %1001 = vmatprep.subr.mxu0 0.0
        %1002 = vmatpush2.xpose.msra.mxu0 0.0
        %1003 = vmatprep.subr.mxu0 0.0
        %1004 = vmatpush2.xpose.msra.mxu0 0.0
        %1005 = vmatprep.subr.mxu0 0.0
        %1006 = vmatpush2.xpose.msra.mxu0 0.0
        %1007 = vmatprep.subr.mxu0 0.0
        %1008 = vmatpush2.xpose.msra.mxu0 0.0
        %1009 = vmatprep.subr.mxu0 0.0
        %1010 = vmatpush2.xpose.msra.mxu0 0.0
        %1011 = vmatprep.subr.mxu0 0.0
        %1012 = vmatpush2.xpose.msra.mxu0 0.0
        %1013 = vmatprep.subr.mxu0 0.0
        %1014 = vmatpush2.xpose.msra.mxu0 0.0
        %1015 = vmatprep.subr.mxu0 0.0
        %1016 = vmatpush2.xpose.msra.mxu0 0.0
        %1017 = vmatprep.subr.mxu0 0.0
        %1018 = vmatpush2.xpose.msra.mxu0 0.0
        %1019 = vmatprep.subr.mxu0 0.0
        %1020 = vmatpush2.xpose.msra.mxu0 0.0
        %1021 = vmatprep.subr.mxu0 0.0
        %1022 = vmatpush2.xpose.msra.mxu0 0.0
        %1023 = vmatprep.subr.mxu0 0.0
        %1024 = vmatpush2.xpose.msra.mxu0 0.0
        %1025 = vmatprep.subr.mxu0 0.0
        %1026 = vmatpush2.xpose.msra.mxu0 0.0
        %1027 = vmatprep.mubr.f32.mxu0 0.0
        %1028 = vmatmul.mubr.f32.gmra.mxu0 %v959
        %v1029 = vpop.f32.mrf.mxu0
        %v1030 = vadd.f32 0.0, %v1029
        %v1031 = vpop.f32.mrf.mxu0
        %1032 = vdwg.mxu0
        %1034 = vrot.lane.b32.xlu0 %v507, 124
        %v1035 = vpop.permute.xlu0 %1034
        %v1037 = vsel %vm801, %v793, 0
        %v1039 = vsel %vm801, %v1035, 0
        %1041 = vmatprep.subr.mxu0 0.0
        %1042 = vmatpush1.xpose.msra.mxu0 0.0
        %1043 = vmatprep.subr.mxu0 0.0
        %1044 = vmatpush1.xpose.msra.mxu0 0.0
        %1045 = vmatprep.subr.mxu0 0.0
        %1046 = vmatpush1.xpose.msra.mxu0 0.0
        %1047 = vmatprep.subr.mxu0 0.0
        %1048 = vmatpush1.xpose.msra.mxu0 0.0
        %1049 = vmatprep.subr.mxu0 0.0
        %1050 = vmatpush1.xpose.msra.mxu0 0.0
        %1051 = vmatprep.subr.mxu0 0.0
        %1052 = vmatpush1.xpose.msra.mxu0 0.0
        %1053 = vmatprep.subr.mxu0 0.0
        %1054 = vmatpush1.xpose.msra.mxu0 0.0
        %1055 = vmatprep.subr.mxu0 0.0
        %1056 = vmatpush1.xpose.msra.mxu0 0.0
        %1057 = vmatprep.subr.mxu0 0.0
        %1058 = vmatpush1.xpose.msra.mxu0 0.0
        %1059 = vmatprep.subr.mxu0 0.0
        %1060 = vmatpush1.xpose.msra.mxu0 0.0
        %1061 = vmatprep.subr.mxu0 0.0
        %1062 = vmatpush1.xpose.msra.mxu0 0.0
        %1063 = vmatprep.subr.mxu0 0.0
        %1064 = vmatpush1.xpose.msra.mxu0 0.0
        %1065 = vmatprep.subr.mxu0 0.0
        %1066 = vmatpush1.xpose.msra.mxu0 0.0
        %1067 = vmatprep.subr.mxu0 0.0
        %1068 = vmatpush1.xpose.msra.mxu0 0.0
        %1069 = vmatprep.subr.mxu0 0.0
        %1070 = vmatpush1.xpose.msra.mxu0 0.0
        %1071 = vmatprep.subr.mxu0 0.0
        %1072 = vmatpush1.xpose.msra.mxu0 %v1039
        %1073 = vmatprep.subr.mxu0 0.0
        %1074 = vmatpush2.xpose.msra.mxu0 0.0
        %1075 = vmatprep.subr.mxu0 0.0
        %1076 = vmatpush2.xpose.msra.mxu0 0.0
        %1077 = vmatprep.subr.mxu0 0.0
        %1078 = vmatpush2.xpose.msra.mxu0 0.0
        %1079 = vmatprep.subr.mxu0 0.0
        %1080 = vmatpush2.xpose.msra.mxu0 0.0
        %1081 = vmatprep.subr.mxu0 0.0
        %1082 = vmatpush2.xpose.msra.mxu0 0.0
        %1083 = vmatprep.subr.mxu0 0.0
        %1084 = vmatpush2.xpose.msra.mxu0 0.0
        %1085 = vmatprep.subr.mxu0 0.0
        %1086 = vmatpush2.xpose.msra.mxu0 0.0
        %1087 = vmatprep.subr.mxu0 0.0
        %1088 = vmatpush2.xpose.msra.mxu0 0.0
        %1089 = vmatprep.subr.mxu0 0.0
        %1090 = vmatpush2.xpose.msra.mxu0 0.0
        %1091 = vmatprep.subr.mxu0 0.0
        %1092 = vmatpush2.xpose.msra.mxu0 0.0
        %1093 = vmatprep.subr.mxu0 0.0
        %1094 = vmatpush2.xpose.msra.mxu0 0.0
        %1095 = vmatprep.subr.mxu0 0.0
        %1096 = vmatpush2.xpose.msra.mxu0 0.0
        %1097 = vmatprep.subr.mxu0 0.0
        %1098 = vmatpush2.xpose.msra.mxu0 0.0
        %1099 = vmatprep.subr.mxu0 0.0
        %1100 = vmatpush2.xpose.msra.mxu0 0.0
        %1101 = vmatprep.subr.mxu0 0.0
        %1102 = vmatpush2.xpose.msra.mxu0 0.0
        %1103 = vmatprep.subr.mxu0 0.0
        %1104 = vmatpush2.xpose.msra.mxu0 0.0
        %1105 = vmatprep.mubr.f32.mxu0 0.0
        %1106 = vmatmul.mubr.f32.gmra.mxu0 %v1037
        %v1107 = vpop.f32.mrf.mxu0
        %v1108 = vadd.f32 0.0, %v1107
        %v1109 = vpop.f32.mrf.mxu0
        %1110 = vdwg.mxu0
        %1112 = vrot.lane.b32.xlu0 %v577, 124
        %v1113 = vpop.permute.xlu0 %1112
        %v1115 = vsel %vm801, %v794, 0
        %v1117 = vsel %vm801, %v1113, 0
        %1119 = vmatprep.subr.mxu0 0.0
        %1120 = vmatpush1.xpose.msra.mxu0 0.0
        %1121 = vmatprep.subr.mxu0 0.0
        %1122 = vmatpush1.xpose.msra.mxu0 0.0
        %1123 = vmatprep.subr.mxu0 0.0
        %1124 = vmatpush1.xpose.msra.mxu0 0.0
        %1125 = vmatprep.subr.mxu0 0.0
        %1126 = vmatpush1.xpose.msra.mxu0 0.0
        %1127 = vmatprep.subr.mxu0 0.0
        %1128 = vmatpush1.xpose.msra.mxu0 0.0
        %1129 = vmatprep.subr.mxu0 0.0
        %1130 = vmatpush1.xpose.msra.mxu0 0.0
        %1131 = vmatprep.subr.mxu0 0.0
        %1132 = vmatpush1.xpose.msra.mxu0 0.0
        %1133 = vmatprep.subr.mxu0 0.0
        %1134 = vmatpush1.xpose.msra.mxu0 0.0
        %1135 = vmatprep.subr.mxu0 0.0
        %1136 = vmatpush1.xpose.msra.mxu0 0.0
        %1137 = vmatprep.subr.mxu0 0.0
        %1138 = vmatpush1.xpose.msra.mxu0 0.0
        %1139 = vmatprep.subr.mxu0 0.0
        %1140 = vmatpush1.xpose.msra.mxu0 0.0
        %1141 = vmatprep.subr.mxu0 0.0
        %1142 = vmatpush1.xpose.msra.mxu0 0.0
        %1143 = vmatprep.subr.mxu0 0.0
        %1144 = vmatpush1.xpose.msra.mxu0 0.0
        %1145 = vmatprep.subr.mxu0 0.0
        %1146 = vmatpush1.xpose.msra.mxu0 0.0
        %1147 = vmatprep.subr.mxu0 0.0
        %1148 = vmatpush1.xpose.msra.mxu0 0.0
        %1149 = vmatprep.subr.mxu0 0.0
        %1150 = vmatpush1.xpose.msra.mxu0 %v1117
        %1151 = vmatprep.subr.mxu0 0.0
        %1152 = vmatpush2.xpose.msra.mxu0 0.0
        %1153 = vmatprep.subr.mxu0 0.0
        %1154 = vmatpush2.xpose.msra.mxu0 0.0
        %1155 = vmatprep.subr.mxu0 0.0
        %1156 = vmatpush2.xpose.msra.mxu0 0.0
        %1157 = vmatprep.subr.mxu0 0.0
        %1158 = vmatpush2.xpose.msra.mxu0 0.0
        %1159 = vmatprep.subr.mxu0 0.0
        %1160 = vmatpush2.xpose.msra.mxu0 0.0
        %1161 = vmatprep.subr.mxu0 0.0
        %1162 = vmatpush2.xpose.msra.mxu0 0.0
        %1163 = vmatprep.subr.mxu0 0.0
        %1164 = vmatpush2.xpose.msra.mxu0 0.0
        %1165 = vmatprep.subr.mxu0 0.0
        %1166 = vmatpush2.xpose.msra.mxu0 0.0
        %1167 = vmatprep.subr.mxu0 0.0
        %1168 = vmatpush2.xpose.msra.mxu0 0.0
        %1169 = vmatprep.subr.mxu0 0.0
        %1170 = vmatpush2.xpose.msra.mxu0 0.0
        %1171 = vmatprep.subr.mxu0 0.0
        %1172 = vmatpush2.xpose.msra.mxu0 0.0
        %1173 = vmatprep.subr.mxu0 0.0
        %1174 = vmatpush2.xpose.msra.mxu0 0.0
        %1175 = vmatprep.subr.mxu0 0.0
        %1176 = vmatpush2.xpose.msra.mxu0 0.0
        %1177 = vmatprep.subr.mxu0 0.0
        %1178 = vmatpush2.xpose.msra.mxu0 0.0
        %1179 = vmatprep.subr.mxu0 0.0
        %1180 = vmatpush2.xpose.msra.mxu0 0.0
        %1181 = vmatprep.subr.mxu0 0.0
        %1182 = vmatpush2.xpose.msra.mxu0 0.0
        %1183 = vmatprep.mubr.f32.mxu0 0.0
        %1184 = vmatmul.mubr.f32.gmra.mxu0 %v1115
        %v1185 = vpop.f32.mrf.mxu0
        %v1186 = vadd.f32 0.0, %v1185
        %v1187 = vpop.f32.mrf.mxu0
        %1188 = vdwg.mxu0
        %1190 = vrot.lane.b32.xlu0 %v647, 124
        %v1191 = vpop.permute.xlu0 %1190
        %v1193 = vsel %vm801, %v795, 0
        %v1195 = vsel %vm801, %v1191, 0
        %1197 = vmatprep.subr.mxu0 0.0
        %1198 = vmatpush1.xpose.msra.mxu0 0.0
        %1199 = vmatprep.subr.mxu0 0.0
        %1200 = vmatpush1.xpose.msra.mxu0 0.0
        %1201 = vmatprep.subr.mxu0 0.0
        %1202 = vmatpush1.xpose.msra.mxu0 0.0
        %1203 = vmatprep.subr.mxu0 0.0
        %1204 = vmatpush1.xpose.msra.mxu0 0.0
        %1205 = vmatprep.subr.mxu0 0.0
        %1206 = vmatpush1.xpose.msra.mxu0 0.0
        %1207 = vmatprep.subr.mxu0 0.0
        %1208 = vmatpush1.xpose.msra.mxu0 0.0
        %1209 = vmatprep.subr.mxu0 0.0
        %1210 = vmatpush1.xpose.msra.mxu0 0.0
        %1211 = vmatprep.subr.mxu0 0.0
        %1212 = vmatpush1.xpose.msra.mxu0 0.0
        %1213 = vmatprep.subr.mxu0 0.0
        %1214 = vmatpush1.xpose.msra.mxu0 0.0
        %1215 = vmatprep.subr.mxu0 0.0
        %1216 = vmatpush1.xpose.msra.mxu0 0.0
        %1217 = vmatprep.subr.mxu0 0.0
        %1218 = vmatpush1.xpose.msra.mxu0 0.0
        %1219 = vmatprep.subr.mxu0 0.0
        %1220 = vmatpush1.xpose.msra.mxu0 0.0
        %1221 = vmatprep.subr.mxu0 0.0
        %1222 = vmatpush1.xpose.msra.mxu0 0.0
        %1223 = vmatprep.subr.mxu0 0.0
        %1224 = vmatpush1.xpose.msra.mxu0 0.0
        %1225 = vmatprep.subr.mxu0 0.0
        %1226 = vmatpush1.xpose.msra.mxu0 0.0
        %1227 = vmatprep.subr.mxu0 0.0
        %1228 = vmatpush1.xpose.msra.mxu0 %v1195
        %1229 = vmatprep.subr.mxu0 0.0
        %1230 = vmatpush2.xpose.msra.mxu0 0.0
        %1231 = vmatprep.subr.mxu0 0.0
        %1232 = vmatpush2.xpose.msra.mxu0 0.0
        %1233 = vmatprep.subr.mxu0 0.0
        %1234 = vmatpush2.xpose.msra.mxu0 0.0
        %1235 = vmatprep.subr.mxu0 0.0
        %1236 = vmatpush2.xpose.msra.mxu0 0.0
        %1237 = vmatprep.subr.mxu0 0.0
        %1238 = vmatpush2.xpose.msra.mxu0 0.0
        %1239 = vmatprep.subr.mxu0 0.0
        %1240 = vmatpush2.xpose.msra.mxu0 0.0
        %1241 = vmatprep.subr.mxu0 0.0
        %1242 = vmatpush2.xpose.msra.mxu0 0.0
        %1243 = vmatprep.subr.mxu0 0.0
        %1244 = vmatpush2.xpose.msra.mxu0 0.0
        %1245 = vmatprep.subr.mxu0 0.0
        %1246 = vmatpush2.xpose.msra.mxu0 0.0
        %1247 = vmatprep.subr.mxu0 0.0
        %1248 = vmatpush2.xpose.msra.mxu0 0.0
        %1249 = vmatprep.subr.mxu0 0.0
        %1250 = vmatpush2.xpose.msra.mxu0 0.0
        %1251 = vmatprep.subr.mxu0 0.0
        %1252 = vmatpush2.xpose.msra.mxu0 0.0
        %1253 = vmatprep.subr.mxu0 0.0
        %1254 = vmatpush2.xpose.msra.mxu0 0.0
        %1255 = vmatprep.subr.mxu0 0.0
        %1256 = vmatpush2.xpose.msra.mxu0 0.0
        %1257 = vmatprep.subr.mxu0 0.0
        %1258 = vmatpush2.xpose.msra.mxu0 0.0
        %1259 = vmatprep.subr.mxu0 0.0
        %1260 = vmatpush2.xpose.msra.mxu0 0.0
        %1261 = vmatprep.mubr.f32.mxu0 0.0
        %1262 = vmatmul.mubr.f32.gmra.mxu0 %v1193
        %v1263 = vpop.f32.mrf.mxu0
        %v1264 = vadd.f32 0.0, %v1263
        %v1265 = vpop.f32.mrf.mxu0
        %1266 = vdwg.mxu0
        %1268 = vrot.lane.b32.xlu0 %v717, 124
        %v1269 = vpop.permute.xlu0 %1268
        %v1271 = vsel %vm801, %v796, 0
        %v1273 = vsel %vm801, %v1269, 0
        %1275 = vmatprep.subr.mxu0 0.0
        %1276 = vmatpush1.xpose.msra.mxu0 0.0
        %1277 = vmatprep.subr.mxu0 0.0
        %1278 = vmatpush1.xpose.msra.mxu0 0.0
        %1279 = vmatprep.subr.mxu0 0.0
        %1280 = vmatpush1.xpose.msra.mxu0 0.0
        %1281 = vmatprep.subr.mxu0 0.0
        %1282 = vmatpush1.xpose.msra.mxu0 0.0
        %1283 = vmatprep.subr.mxu0 0.0
        %1284 = vmatpush1.xpose.msra.mxu0 0.0
        %1285 = vmatprep.subr.mxu0 0.0
        %1286 = vmatpush1.xpose.msra.mxu0 0.0
        %1287 = vmatprep.subr.mxu0 0.0
        %1288 = vmatpush1.xpose.msra.mxu0 0.0
        %1289 = vmatprep.subr.mxu0 0.0
        %1290 = vmatpush1.xpose.msra.mxu0 0.0
        %1291 = vmatprep.subr.mxu0 0.0
        %1292 = vmatpush1.xpose.msra.mxu0 0.0
        %1293 = vmatprep.subr.mxu0 0.0
        %1294 = vmatpush1.xpose.msra.mxu0 0.0
        %1295 = vmatprep.subr.mxu0 0.0
        %1296 = vmatpush1.xpose.msra.mxu0 0.0
        %1297 = vmatprep.subr.mxu0 0.0
        %1298 = vmatpush1.xpose.msra.mxu0 0.0
        %1299 = vmatprep.subr.mxu0 0.0
        %1300 = vmatpush1.xpose.msra.mxu0 0.0
        %1301 = vmatprep.subr.mxu0 0.0
        %1302 = vmatpush1.xpose.msra.mxu0 0.0
        %1303 = vmatprep.subr.mxu0 0.0
        %1304 = vmatpush1.xpose.msra.mxu0 0.0
        %1305 = vmatprep.subr.mxu0 0.0
        %1306 = vmatpush1.xpose.msra.mxu0 %v1273
        %1307 = vmatprep.subr.mxu0 0.0
        %1308 = vmatpush2.xpose.msra.mxu0 0.0
        %1309 = vmatprep.subr.mxu0 0.0
        %1310 = vmatpush2.xpose.msra.mxu0 0.0
        %1311 = vmatprep.subr.mxu0 0.0
        %1312 = vmatpush2.xpose.msra.mxu0 0.0
        %1313 = vmatprep.subr.mxu0 0.0
        %1314 = vmatpush2.xpose.msra.mxu0 0.0
        %1315 = vmatprep.subr.mxu0 0.0
        %1316 = vmatpush2.xpose.msra.mxu0 0.0
        %1317 = vmatprep.subr.mxu0 0.0
        %1318 = vmatpush2.xpose.msra.mxu0 0.0
        %1319 = vmatprep.subr.mxu0 0.0
        %1320 = vmatpush2.xpose.msra.mxu0 0.0
        %1321 = vmatprep.subr.mxu0 0.0
        %1322 = vmatpush2.xpose.msra.mxu0 0.0
        %1323 = vmatprep.subr.mxu0 0.0
        %1324 = vmatpush2.xpose.msra.mxu0 0.0
        %1325 = vmatprep.subr.mxu0 0.0
        %1326 = vmatpush2.xpose.msra.mxu0 0.0
        %1327 = vmatprep.subr.mxu0 0.0
        %1328 = vmatpush2.xpose.msra.mxu0 0.0
        %1329 = vmatprep.subr.mxu0 0.0
        %1330 = vmatpush2.xpose.msra.mxu0 0.0
        %1331 = vmatprep.subr.mxu0 0.0
        %1332 = vmatpush2.xpose.msra.mxu0 0.0
        %1333 = vmatprep.subr.mxu0 0.0
        %1334 = vmatpush2.xpose.msra.mxu0 0.0
        %1335 = vmatprep.subr.mxu0 0.0
        %1336 = vmatpush2.xpose.msra.mxu0 0.0
        %1337 = vmatprep.subr.mxu0 0.0
        %1338 = vmatpush2.xpose.msra.mxu0 0.0
        %1339 = vmatprep.mubr.f32.mxu0 0.0
        %1340 = vmatmul.mubr.f32.gmra.mxu0 %v1271
        %v1341 = vpop.f32.mrf.mxu0
        %v1342 = vadd.f32 0.0, %v1341
        %v1343 = vpop.f32.mrf.mxu0
        %1344 = vdwg.mxu0
        %1346 = vrot.lane.b32.xlu0 %v787, 124
        %v1347 = vpop.permute.xlu0 %1346
        %v1349 = vsel %vm801, %v797, 0
        %v1351 = vsel %vm801, %v1347, 0
        %1353 = vmatprep.subr.mxu0 0.0
        %1354 = vmatpush1.xpose.msra.mxu0 0.0
        %1355 = vmatprep.subr.mxu0 0.0
        %1356 = vmatpush1.xpose.msra.mxu0 0.0
        %1357 = vmatprep.subr.mxu0 0.0
        %1358 = vmatpush1.xpose.msra.mxu0 0.0
        %1359 = vmatprep.subr.mxu0 0.0
        %1360 = vmatpush1.xpose.msra.mxu0 0.0
        %1361 = vmatprep.subr.mxu0 0.0
        %1362 = vmatpush1.xpose.msra.mxu0 0.0
        %1363 = vmatprep.subr.mxu0 0.0
        %1364 = vmatpush1.xpose.msra.mxu0 0.0
        %1365 = vmatprep.subr.mxu0 0.0
        %1366 = vmatpush1.xpose.msra.mxu0 0.0
        %1367 = vmatprep.subr.mxu0 0.0
        %1368 = vmatpush1.xpose.msra.mxu0 0.0
        %1369 = vmatprep.subr.mxu0 0.0
        %1370 = vmatpush1.xpose.msra.mxu0 0.0
        %1371 = vmatprep.subr.mxu0 0.0
        %1372 = vmatpush1.xpose.msra.mxu0 0.0
        %1373 = vmatprep.subr.mxu0 0.0
        %1374 = vmatpush1.xpose.msra.mxu0 0.0
        %1375 = vmatprep.subr.mxu0 0.0
        %1376 = vmatpush1.xpose.msra.mxu0 0.0
        %1377 = vmatprep.subr.mxu0 0.0
        %1378 = vmatpush1.xpose.msra.mxu0 0.0
        %1379 = vmatprep.subr.mxu0 0.0
        %1380 = vmatpush1.xpose.msra.mxu0 0.0
        %1381 = vmatprep.subr.mxu0 0.0
        %1382 = vmatpush1.xpose.msra.mxu0 0.0
        %1383 = vmatprep.subr.mxu0 0.0
        %1384 = vmatpush1.xpose.msra.mxu0 %v1351
        %1385 = vmatprep.subr.mxu0 0.0
        %1386 = vmatpush2.xpose.msra.mxu0 0.0
        %1387 = vmatprep.subr.mxu0 0.0
        %1388 = vmatpush2.xpose.msra.mxu0 0.0
        %1389 = vmatprep.subr.mxu0 0.0
        %1390 = vmatpush2.xpose.msra.mxu0 0.0
        %1391 = vmatprep.subr.mxu0 0.0
        %1392 = vmatpush2.xpose.msra.mxu0 0.0
        %1393 = vmatprep.subr.mxu0 0.0
        %1394 = vmatpush2.xpose.msra.mxu0 0.0
        %1395 = vmatprep.subr.mxu0 0.0
        %1396 = vmatpush2.xpose.msra.mxu0 0.0
        %1397 = vmatprep.subr.mxu0 0.0
        %1398 = vmatpush2.xpose.msra.mxu0 0.0
        %1399 = vmatprep.subr.mxu0 0.0
        %1400 = vmatpush2.xpose.msra.mxu0 0.0
        %1401 = vmatprep.subr.mxu0 0.0
        %1402 = vmatpush2.xpose.msra.mxu0 0.0
        %1403 = vmatprep.subr.mxu0 0.0
        %1404 = vmatpush2.xpose.msra.mxu0 0.0
        %1405 = vmatprep.subr.mxu0 0.0
        %1406 = vmatpush2.xpose.msra.mxu0 0.0
        %1407 = vmatprep.subr.mxu0 0.0
        %1408 = vmatpush2.xpose.msra.mxu0 0.0
        %1409 = vmatprep.subr.mxu0 0.0
        %1410 = vmatpush2.xpose.msra.mxu0 0.0
        %1411 = vmatprep.subr.mxu0 0.0
        %1412 = vmatpush2.xpose.msra.mxu0 0.0
        %1413 = vmatprep.subr.mxu0 0.0
        %1414 = vmatpush2.xpose.msra.mxu0 0.0
        %1415 = vmatprep.subr.mxu0 0.0
        %1416 = vmatpush2.xpose.msra.mxu0 0.0
        %1417 = vmatprep.mubr.f32.mxu0 0.0
        %1418 = vmatmul.mubr.f32.gmra.mxu0 %v1349
        %v1419 = vpop.f32.mrf.mxu0
        %v1420 = vadd.f32 0.0, %v1419
        %v1421 = vpop.f32.mrf.mxu0
        %1422 = vdwg.mxu0
        %vm1423 = vcmask 64512
        %v1424 = vsel %vm1423, %v874, -inf
        %1425 = vmax.xlane.f32.xlu0 %v1424
        %v1426 = vpop.xlane.xlu0 %1425
        %v1427 = vsel %vm1423, %v952, -inf
        %1428 = vmax.xlane.f32.xlu0 %v1427
        %v1429 = vpop.xlane.xlu0 %1428
        %v1430 = vsel %vm1423, %v1030, -inf
        %1431 = vmax.xlane.f32.xlu0 %v1430
        %v1432 = vpop.xlane.xlu0 %1431
        %v1433 = vsel %vm1423, %v1108, -inf
        %1434 = vmax.xlane.f32.xlu0 %v1433
        %v1435 = vpop.xlane.xlu0 %1434
        %v1436 = vsel %vm1423, %v1186, -inf
        %1437 = vmax.xlane.f32.xlu0 %v1436
        %v1438 = vpop.xlane.xlu0 %1437
        %v1439 = vsel %vm1423, %v1264, -inf
        %1440 = vmax.xlane.f32.xlu0 %v1439
        %v1441 = vpop.xlane.xlu0 %1440
        %v1442 = vsel %vm1423, %v1342, -inf
        %1443 = vmax.xlane.f32.xlu0 %v1442
        %v1444 = vpop.xlane.xlu0 %1443
        %v1445 = vsel %vm1423, %v1420, -inf
        %1446 = vmax.xlane.f32.xlu0 %v1445
        %v1447 = vpop.xlane.xlu0 %1446
        %v1448 = vsub.f32 %v874, %v1426
        %v1449 = vsub.f32 %v952, %v1429
        %v1450 = vsub.f32 %v1030, %v1432
        %v1451 = vsub.f32 %v1108, %v1435
        %v1452 = vsub.f32 %v1186, %v1438
        %v1453 = vsub.f32 %v1264, %v1441
        %v1454 = vsub.f32 %v1342, %v1444
        %v1455 = vsub.f32 %v1420, %v1447
        %v1456 = vmul.f32 %v1448, 1.442695
        %v1457 = vpow.pop %v1456
        %v1458 = vmul.f32 %v1449, 1.442695
        %v1459 = vpow.pop %v1458
        %v1460 = vmul.f32 %v1450, 1.442695
        %v1461 = vpow.pop %v1460
        %v1462 = vmul.f32 %v1451, 1.442695
        %v1463 = vpow.pop %v1462
        %v1464 = vmul.f32 %v1452, 1.442695
        %v1465 = vpow.pop %v1464
        %v1466 = vmul.f32 %v1453, 1.442695
        %v1467 = vpow.pop %v1466
        %v1468 = vmul.f32 %v1454, 1.442695
        %v1469 = vpow.pop %v1468
        %v1470 = vmul.f32 %v1455, 1.442695
        %v1471 = vpow.pop %v1470
        %v1472 = vsel %vm1423, %v1457, 0.0
        %1473 = vadd.xlane.f32.xlu0 %v1472
        %v1474 = vpop.xlane.xlu0 %1473
        %v1475 = vsel %vm1423, %v1459, 0.0
        %1476 = vadd.xlane.f32.xlu0 %v1475
        %v1477 = vpop.xlane.xlu0 %1476
        %v1478 = vsel %vm1423, %v1461, 0.0
        %1479 = vadd.xlane.f32.xlu0 %v1478
        %v1480 = vpop.xlane.xlu0 %1479
        %v1481 = vsel %vm1423, %v1463, 0.0
        %1482 = vadd.xlane.f32.xlu0 %v1481
        %v1483 = vpop.xlane.xlu0 %1482
        %v1484 = vsel %vm1423, %v1465, 0.0
        %1485 = vadd.xlane.f32.xlu0 %v1484
        %v1486 = vpop.xlane.xlu0 %1485
        %v1487 = vsel %vm1423, %v1467, 0.0
        %1488 = vadd.xlane.f32.xlu0 %v1487
        %v1489 = vpop.xlane.xlu0 %1488
        %v1490 = vsel %vm1423, %v1469, 0.0
        %1491 = vadd.xlane.f32.xlu0 %v1490
        %v1492 = vpop.xlane.xlu0 %1491
        %v1493 = vsel %vm1423, %v1471, 0.0
        %1494 = vadd.xlane.f32.xlu0 %v1493
        %v1495 = vpop.xlane.xlu0 %1494
        %v1496 = vrcp.pop %v1474
        %v1497 = vrcp.pop %v1477
        %v1498 = vrcp.pop %v1480
        %v1499 = vrcp.pop %v1483
        %v1500 = vrcp.pop %v1486
        %v1501 = vrcp.pop %v1489
        %v1502 = vrcp.pop %v1492
        %v1503 = vrcp.pop %v1495
        %v1504 = vmul.f32 %v1457, %v1496
        %v1505 = vmul.f32 %v1459, %v1497
        %v1506 = vmul.f32 %v1461, %v1498
        %v1507 = vmul.f32 %v1463, %v1499
        %v1508 = vmul.f32 %v1465, %v1500
        %v1509 = vmul.f32 %v1467, %v1501
        %v1510 = vmul.f32 %v1469, %v1502
        %v1511 = vmul.f32 %v1471, %v1503
        %1512 = vrot.lane.b32.xlu0 %v297, 120
        %v1513 = vpop.permute.xlu0 %1512
        %v1516 = vsel %vm1423, %v1504, 0
        %1518 = vmatprep.subr.mxu0 0.0
        %1519 = vmatpush1.msra.mxu0 0.0
        %1520 = vmatprep.subr.mxu0 0.0
        %1521 = vmatpush1.msra.mxu0 0.0
        %1522 = vmatprep.subr.mxu0 0.0
        %1523 = vmatpush1.msra.mxu0 0.0
        %1524 = vmatprep.subr.mxu0 0.0
        %1525 = vmatpush1.msra.mxu0 0.0
        %1526 = vmatprep.subr.mxu0 0.0
        %1527 = vmatpush1.msra.mxu0 0.0
        %1528 = vmatprep.subr.mxu0 0.0
        %1529 = vmatpush1.msra.mxu0 0.0
        %1530 = vmatprep.subr.mxu0 0.0
        %1531 = vmatpush1.msra.mxu0 0.0
        %1532 = vmatprep.subr.mxu0 0.0
        %1533 = vmatpush1.msra.mxu0 0.0
        %1534 = vmatprep.subr.mxu0 0.0
        %1535 = vmatpush1.msra.mxu0 0.0
        %1536 = vmatprep.subr.mxu0 0.0
        %1537 = vmatpush1.msra.mxu0 0.0
        %1538 = vmatprep.subr.mxu0 0.0
        %1539 = vmatpush1.msra.mxu0 0.0
        %1540 = vmatprep.subr.mxu0 0.0
        %1541 = vmatpush1.msra.mxu0 0.0
        %1542 = vmatprep.subr.mxu0 0.0
        %1543 = vmatpush1.msra.mxu0 0.0
        %1544 = vmatprep.subr.mxu0 0.0
        %1545 = vmatpush1.msra.mxu0 0.0
        %1546 = vmatprep.subr.mxu0 0.0
        %1547 = vmatpush1.msra.mxu0 0.0
        %1548 = vmatprep.subr.mxu0 0.0
        %1549 = vmatpush1.msra.mxu0 %v1513
        %1550 = vmatprep.subr.mxu0 0.0
        %1551 = vmatpush2.msra.mxu0 0.0
        %1552 = vmatprep.subr.mxu0 0.0
        %1553 = vmatpush2.msra.mxu0 0.0
        %1554 = vmatprep.subr.mxu0 0.0
        %1555 = vmatpush2.msra.mxu0 0.0
        %1556 = vmatprep.subr.mxu0 0.0
        %1557 = vmatpush2.msra.mxu0 0.0
        %1558 = vmatprep.subr.mxu0 0.0
        %1559 = vmatpush2.msra.mxu0 0.0
        %1560 = vmatprep.subr.mxu0 0.0
        %1561 = vmatpush2.msra.mxu0 0.0
        %1562 = vmatprep.subr.mxu0 0.0
        %1563 = vmatpush2.msra.mxu0 0.0
        %1564 = vmatprep.subr.mxu0 0.0
        %1565 = vmatpush2.msra.mxu0 0.0
        %1566 = vmatprep.subr.mxu0 0.0
        %1567 = vmatpush2.msra.mxu0 0.0
        %1568 = vmatprep.subr.mxu0 0.0
        %1569 = vmatpush2.msra.mxu0 0.0
        %1570 = vmatprep.subr.mxu0 0.0
        %1571 = vmatpush2.msra.mxu0 0.0
        %1572 = vmatprep.subr.mxu0 0.0
        %1573 = vmatpush2.msra.mxu0 0.0
        %1574 = vmatprep.subr.mxu0 0.0
        %1575 = vmatpush2.msra.mxu0 0.0
        %1576 = vmatprep.subr.mxu0 0.0
        %1577 = vmatpush2.msra.mxu0 0.0
        %1578 = vmatprep.subr.mxu0 0.0
        %1579 = vmatpush2.msra.mxu0 0.0
        %1580 = vmatprep.subr.mxu0 0.0
        %1581 = vmatpush2.msra.mxu0 0.0
        %1582 = vmatprep.mubr.f32.mxu0 0.0
        %1583 = vmatmul.mubr.f32.gmra.mxu0 %v1516
        %v1584 = vpop.f32.mrf.mxu0
        %v1585 = vadd.f32 0.0, %v1584
        %v1586 = vpop.f32.mrf.mxu0
        %1587 = vdwg.mxu0
        %1588 = vrot.lane.b32.xlu0 %v367, 120
        %v1589 = vpop.permute.xlu0 %1588
        %v1592 = vsel %vm1423, %v1505, 0
        %1594 = vmatprep.subr.mxu0 0.0
        %1595 = vmatpush1.msra.mxu0 0.0
        %1596 = vmatprep.subr.mxu0 0.0
        %1597 = vmatpush1.msra.mxu0 0.0
        %1598 = vmatprep.subr.mxu0 0.0
        %1599 = vmatpush1.msra.mxu0 0.0
        %1600 = vmatprep.subr.mxu0 0.0
        %1601 = vmatpush1.msra.mxu0 0.0
        %1602 = vmatprep.subr.mxu0 0.0
        %1603 = vmatpush1.msra.mxu0 0.0
        %1604 = vmatprep.subr.mxu0 0.0
        %1605 = vmatpush1.msra.mxu0 0.0
        %1606 = vmatprep.subr.mxu0 0.0
        %1607 = vmatpush1.msra.mxu0 0.0
        %1608 = vmatprep.subr.mxu0 0.0
        %1609 = vmatpush1.msra.mxu0 0.0
        %1610 = vmatprep.subr.mxu0 0.0
        %1611 = vmatpush1.msra.mxu0 0.0
        %1612 = vmatprep.subr.mxu0 0.0
        %1613 = vmatpush1.msra.mxu0 0.0
        %1614 = vmatprep.subr.mxu0 0.0
        %1615 = vmatpush1.msra.mxu0 0.0
        %1616 = vmatprep.subr.mxu0 0.0
        %1617 = vmatpush1.msra.mxu0 0.0
        %1618 = vmatprep.subr.mxu0 0.0
        %1619 = vmatpush1.msra.mxu0 0.0
        %1620 = vmatprep.subr.mxu0 0.0
        %1621 = vmatpush1.msra.mxu0 0.0
        %1622 = vmatprep.subr.mxu0 0.0
        %1623 = vmatpush1.msra.mxu0 0.0
        %1624 = vmatprep.subr.mxu0 0.0
        %1625 = vmatpush1.msra.mxu0 %v1589
        %1626 = vmatprep.subr.mxu0 0.0
        %1627 = vmatpush2.msra.mxu0 0.0
        %1628 = vmatprep.subr.mxu0 0.0
        %1629 = vmatpush2.msra.mxu0 0.0
        %1630 = vmatprep.subr.mxu0 0.0
        %1631 = vmatpush2.msra.mxu0 0.0
        %1632 = vmatprep.subr.mxu0 0.0
        %1633 = vmatpush2.msra.mxu0 0.0
        %1634 = vmatprep.subr.mxu0 0.0
        %1635 = vmatpush2.msra.mxu0 0.0
        %1636 = vmatprep.subr.mxu0 0.0
        %1637 = vmatpush2.msra.mxu0 0.0
        %1638 = vmatprep.subr.mxu0 0.0
        %1639 = vmatpush2.msra.mxu0 0.0
        %1640 = vmatprep.subr.mxu0 0.0
        %1641 = vmatpush2.msra.mxu0 0.0
        %1642 = vmatprep.subr.mxu0 0.0
        %1643 = vmatpush2.msra.mxu0 0.0
        %1644 = vmatprep.subr.mxu0 0.0
        %1645 = vmatpush2.msra.mxu0 0.0
        %1646 = vmatprep.subr.mxu0 0.0
        %1647 = vmatpush2.msra.mxu0 0.0
        %1648 = vmatprep.subr.mxu0 0.0
        %1649 = vmatpush2.msra.mxu0 0.0
        %1650 = vmatprep.subr.mxu0 0.0
        %1651 = vmatpush2.msra.mxu0 0.0
        %1652 = vmatprep.subr.mxu0 0.0
        %1653 = vmatpush2.msra.mxu0 0.0
        %1654 = vmatprep.subr.mxu0 0.0
        %1655 = vmatpush2.msra.mxu0 0.0
        %1656 = vmatprep.subr.mxu0 0.0
        %1657 = vmatpush2.msra.mxu0 0.0
        %1658 = vmatprep.mubr.f32.mxu0 0.0
        %1659 = vmatmul.mubr.f32.gmra.mxu0 %v1592
        %v1660 = vpop.f32.mrf.mxu0
        %v1661 = vadd.f32 0.0, %v1660
        %v1662 = vpop.f32.mrf.mxu0
        %1663 = vdwg.mxu0
        %1664 = vrot.lane.b32.xlu0 %v437, 120
        %v1665 = vpop.permute.xlu0 %1664
        %v1668 = vsel %vm1423, %v1506, 0
        %1670 = vmatprep.subr.mxu0 0.0
        %1671 = vmatpush1.msra.mxu0 0.0
        %1672 = vmatprep.subr.mxu0 0.0
        %1673 = vmatpush1.msra.mxu0 0.0
        %1674 = vmatprep.subr.mxu0 0.0
        %1675 = vmatpush1.msra.mxu0 0.0
        %1676 = vmatprep.subr.mxu0 0.0
        %1677 = vmatpush1.msra.mxu0 0.0
        %1678 = vmatprep.subr.mxu0 0.0
        %1679 = vmatpush1.msra.mxu0 0.0
        %1680 = vmatprep.subr.mxu0 0.0
        %1681 = vmatpush1.msra.mxu0 0.0
        %1682 = vmatprep.subr.mxu0 0.0
        %1683 = vmatpush1.msra.mxu0 0.0
        %1684 = vmatprep.subr.mxu0 0.0
        %1685 = vmatpush1.msra.mxu0 0.0
        %1686 = vmatprep.subr.mxu0 0.0
        %1687 = vmatpush1.msra.mxu0 0.0
        %1688 = vmatprep.subr.mxu0 0.0
        %1689 = vmatpush1.msra.mxu0 0.0
        %1690 = vmatprep.subr.mxu0 0.0
        %1691 = vmatpush1.msra.mxu0 0.0
        %1692 = vmatprep.subr.mxu0 0.0
        %1693 = vmatpush1.msra.mxu0 0.0
        %1694 = vmatprep.subr.mxu0 0.0
        %1695 = vmatpush1.msra.mxu0 0.0
        %1696 = vmatprep.subr.mxu0 0.0
        %1697 = vmatpush1.msra.mxu0 0.0
        %1698 = vmatprep.subr.mxu0 0.0
        %1699 = vmatpush1.msra.mxu0 0.0
        %1700 = vmatprep.subr.mxu0 0.0
        %1701 = vmatpush1.msra.mxu0 %v1665
        %1702 = vmatprep.subr.mxu0 0.0
        %1703 = vmatpush2.msra.mxu0 0.0
        %1704 = vmatprep.subr.mxu0 0.0
        %1705 = vmatpush2.msra.mxu0 0.0
        %1706 = vmatprep.subr.mxu0 0.0
        %1707 = vmatpush2.msra.mxu0 0.0
        %1708 = vmatprep.subr.mxu0 0.0
        %1709 = vmatpush2.msra.mxu0 0.0
        %1710 = vmatprep.subr.mxu0 0.0
        %1711 = vmatpush2.msra.mxu0 0.0
        %1712 = vmatprep.subr.mxu0 0.0
        %1713 = vmatpush2.msra.mxu0 0.0
        %1714 = vmatprep.subr.mxu0 0.0
        %1715 = vmatpush2.msra.mxu0 0.0
        %1716 = vmatprep.subr.mxu0 0.0
        %1717 = vmatpush2.msra.mxu0 0.0
        %1718 = vmatprep.subr.mxu0 0.0
        %1719 = vmatpush2.msra.mxu0 0.0
        %1720 = vmatprep.subr.mxu0 0.0
        %1721 = vmatpush2.msra.mxu0 0.0
        %1722 = vmatprep.subr.mxu0 0.0
        %1723 = vmatpush2.msra.mxu0 0.0
        %1724 = vmatprep.subr.mxu0 0.0
        %1725 = vmatpush2.msra.mxu0 0.0
        %1726 = vmatprep.subr.mxu0 0.0
        %1727 = vmatpush2.msra.mxu0 0.0
        %1728 = vmatprep.subr.mxu0 0.0
        %1729 = vmatpush2.msra.mxu0 0.0
        %1730 = vmatprep.subr.mxu0 0.0
        %1731 = vmatpush2.msra.mxu0 0.0
        %1732 = vmatprep.subr.mxu0 0.0
        %1733 = vmatpush2.msra.mxu0 0.0
        %1734 = vmatprep.mubr.f32.mxu0 0.0
        %1735 = vmatmul.mubr.f32.gmra.mxu0 %v1668
        %v1736 = vpop.f32.mrf.mxu0
        %v1737 = vadd.f32 0.0, %v1736
        %v1738 = vpop.f32.mrf.mxu0
        %1739 = vdwg.mxu0
        %1740 = vrot.lane.b32.xlu0 %v507, 120
        %v1741 = vpop.permute.xlu0 %1740
        %v1744 = vsel %vm1423, %v1507, 0
        %1746 = vmatprep.subr.mxu0 0.0
        %1747 = vmatpush1.msra.mxu0 0.0
        %1748 = vmatprep.subr.mxu0 0.0
        %1749 = vmatpush1.msra.mxu0 0.0
        %1750 = vmatprep.subr.mxu0 0.0
        %1751 = vmatpush1.msra.mxu0 0.0
        %1752 = vmatprep.subr.mxu0 0.0
        %1753 = vmatpush1.msra.mxu0 0.0
        %1754 = vmatprep.subr.mxu0 0.0
        %1755 = vmatpush1.msra.mxu0 0.0
        %1756 = vmatprep.subr.mxu0 0.0
        %1757 = vmatpush1.msra.mxu0 0.0
        %1758 = vmatprep.subr.mxu0 0.0
        %1759 = vmatpush1.msra.mxu0 0.0
        %1760 = vmatprep.subr.mxu0 0.0
        %1761 = vmatpush1.msra.mxu0 0.0
        %1762 = vmatprep.subr.mxu0 0.0
        %1763 = vmatpush1.msra.mxu0 0.0
        %1764 = vmatprep.subr.mxu0 0.0
        %1765 = vmatpush1.msra.mxu0 0.0
        %1766 = vmatprep.subr.mxu0 0.0
        %1767 = vmatpush1.msra.mxu0 0.0
        %1768 = vmatprep.subr.mxu0 0.0
        %1769 = vmatpush1.msra.mxu0 0.0
        %1770 = vmatprep.subr.mxu0 0.0
        %1771 = vmatpush1.msra.mxu0 0.0
        %1772 = vmatprep.subr.mxu0 0.0
        %1773 = vmatpush1.msra.mxu0 0.0
        %1774 = vmatprep.subr.mxu0 0.0
        %1775 = vmatpush1.msra.mxu0 0.0
        %1776 = vmatprep.subr.mxu0 0.0
        %1777 = vmatpush1.msra.mxu0 %v1741
        %1778 = vmatprep.subr.mxu0 0.0
        %1779 = vmatpush2.msra.mxu0 0.0
        %1780 = vmatprep.subr.mxu0 0.0
        %1781 = vmatpush2.msra.mxu0 0.0
        %1782 = vmatprep.subr.mxu0 0.0
        %1783 = vmatpush2.msra.mxu0 0.0
        %1784 = vmatprep.subr.mxu0 0.0
        %1785 = vmatpush2.msra.mxu0 0.0
        %1786 = vmatprep.subr.mxu0 0.0
        %1787 = vmatpush2.msra.mxu0 0.0
        %1788 = vmatprep.subr.mxu0 0.0
        %1789 = vmatpush2.msra.mxu0 0.0
        %1790 = vmatprep.subr.mxu0 0.0
        %1791 = vmatpush2.msra.mxu0 0.0
        %1792 = vmatprep.subr.mxu0 0.0
        %1793 = vmatpush2.msra.mxu0 0.0
        %1794 = vmatprep.subr.mxu0 0.0
        %1795 = vmatpush2.msra.mxu0 0.0
        %1796 = vmatprep.subr.mxu0 0.0
        %1797 = vmatpush2.msra.mxu0 0.0
        %1798 = vmatprep.subr.mxu0 0.0
        %1799 = vmatpush2.msra.mxu0 0.0
        %1800 = vmatprep.subr.mxu0 0.0
        %1801 = vmatpush2.msra.mxu0 0.0
        %1802 = vmatprep.subr.mxu0 0.0
        %1803 = vmatpush2.msra.mxu0 0.0
        %1804 = vmatprep.subr.mxu0 0.0
        %1805 = vmatpush2.msra.mxu0 0.0
        %1806 = vmatprep.subr.mxu0 0.0
        %1807 = vmatpush2.msra.mxu0 0.0
        %1808 = vmatprep.subr.mxu0 0.0
        %1809 = vmatpush2.msra.mxu0 0.0
        %1810 = vmatprep.mubr.f32.mxu0 0.0
        %1811 = vmatmul.mubr.f32.gmra.mxu0 %v1744
        %v1812 = vpop.f32.mrf.mxu0
        %v1813 = vadd.f32 0.0, %v1812
        %v1814 = vpop.f32.mrf.mxu0
        %1815 = vdwg.mxu0
        %1816 = vrot.lane.b32.xlu0 %v577, 120
        %v1817 = vpop.permute.xlu0 %1816
        %v1820 = vsel %vm1423, %v1508, 0
        %1822 = vmatprep.subr.mxu0 0.0
        %1823 = vmatpush1.msra.mxu0 0.0
        %1824 = vmatprep.subr.mxu0 0.0
        %1825 = vmatpush1.msra.mxu0 0.0
        %1826 = vmatprep.subr.mxu0 0.0
        %1827 = vmatpush1.msra.mxu0 0.0
        %1828 = vmatprep.subr.mxu0 0.0
        %1829 = vmatpush1.msra.mxu0 0.0
        %1830 = vmatprep.subr.mxu0 0.0
        %1831 = vmatpush1.msra.mxu0 0.0
        %1832 = vmatprep.subr.mxu0 0.0
        %1833 = vmatpush1.msra.mxu0 0.0
        %1834 = vmatprep.subr.mxu0 0.0
        %1835 = vmatpush1.msra.mxu0 0.0
        %1836 = vmatprep.subr.mxu0 0.0
        %1837 = vmatpush1.msra.mxu0 0.0
        %1838 = vmatprep.subr.mxu0 0.0
        %1839 = vmatpush1.msra.mxu0 0.0
        %1840 = vmatprep.subr.mxu0 0.0
        %1841 = vmatpush1.msra.mxu0 0.0
        %1842 = vmatprep.subr.mxu0 0.0
        %1843 = vmatpush1.msra.mxu0 0.0
        %1844 = vmatprep.subr.mxu0 0.0
        %1845 = vmatpush1.msra.mxu0 0.0
        %1846 = vmatprep.subr.mxu0 0.0
        %1847 = vmatpush1.msra.mxu0 0.0
        %1848 = vmatprep.subr.mxu0 0.0
        %1849 = vmatpush1.msra.mxu0 0.0
        %1850 = vmatprep.subr.mxu0 0.0
        %1851 = vmatpush1.msra.mxu0 0.0
        %1852 = vmatprep.subr.mxu0 0.0
        %1853 = vmatpush1.msra.mxu0 %v1817
        %1854 = vmatprep.subr.mxu0 0.0
        %1855 = vmatpush2.msra.mxu0 0.0
        %1856 = vmatprep.subr.mxu0 0.0
        %1857 = vmatpush2.msra.mxu0 0.0
        %1858 = vmatprep.subr.mxu0 0.0
        %1859 = vmatpush2.msra.mxu0 0.0
        %1860 = vmatprep.subr.mxu0 0.0
        %1861 = vmatpush2.msra.mxu0 0.0
        %1862 = vmatprep.subr.mxu0 0.0
        %1863 = vmatpush2.msra.mxu0 0.0
        %1864 = vmatprep.subr.mxu0 0.0
        %1865 = vmatpush2.msra.mxu0 0.0
        %1866 = vmatprep.subr.mxu0 0.0
        %1867 = vmatpush2.msra.mxu0 0.0
        %1868 = vmatprep.subr.mxu0 0.0
        %1869 = vmatpush2.msra.mxu0 0.0
        %1870 = vmatprep.subr.mxu0 0.0
        %1871 = vmatpush2.msra.mxu0 0.0
        %1872 = vmatprep.subr.mxu0 0.0
        %1873 = vmatpush2.msra.mxu0 0.0
        %1874 = vmatprep.subr.mxu0 0.0
        %1875 = vmatpush2.msra.mxu0 0.0
        %1876 = vmatprep.subr.mxu0 0.0
        %1877 = vmatpush2.msra.mxu0 0.0
        %1878 = vmatprep.subr.mxu0 0.0
        %1879 = vmatpush2.msra.mxu0 0.0
        %1880 = vmatprep.subr.mxu0 0.0
        %1881 = vmatpush2.msra.mxu0 0.0
        %1882 = vmatprep.subr.mxu0 0.0
        %1883 = vmatpush2.msra.mxu0 0.0
        %1884 = vmatprep.subr.mxu0 0.0
        %1885 = vmatpush2.msra.mxu0 0.0
        %1886 = vmatprep.mubr.f32.mxu0 0.0
        %1887 = vmatmul.mubr.f32.gmra.mxu0 %v1820
        %v1888 = vpop.f32.mrf.mxu0
        %v1889 = vadd.f32 0.0, %v1888
        %v1890 = vpop.f32.mrf.mxu0
        %1891 = vdwg.mxu0
        %1892 = vrot.lane.b32.xlu0 %v647, 120
        %v1893 = vpop.permute.xlu0 %1892
        %v1896 = vsel %vm1423, %v1509, 0
        %1898 = vmatprep.subr.mxu0 0.0
        %1899 = vmatpush1.msra.mxu0 0.0
        %1900 = vmatprep.subr.mxu0 0.0
        %1901 = vmatpush1.msra.mxu0 0.0
        %1902 = vmatprep.subr.mxu0 0.0
        %1903 = vmatpush1.msra.mxu0 0.0
        %1904 = vmatprep.subr.mxu0 0.0
        %1905 = vmatpush1.msra.mxu0 0.0
        %1906 = vmatprep.subr.mxu0 0.0
        %1907 = vmatpush1.msra.mxu0 0.0
        %1908 = vmatprep.subr.mxu0 0.0
        %1909 = vmatpush1.msra.mxu0 0.0
        %1910 = vmatprep.subr.mxu0 0.0
        %1911 = vmatpush1.msra.mxu0 0.0
        %1912 = vmatprep.subr.mxu0 0.0
        %1913 = vmatpush1.msra.mxu0 0.0
        %1914 = vmatprep.subr.mxu0 0.0
        %1915 = vmatpush1.msra.mxu0 0.0
        %1916 = vmatprep.subr.mxu0 0.0
        %1917 = vmatpush1.msra.mxu0 0.0
        %1918 = vmatprep.subr.mxu0 0.0
        %1919 = vmatpush1.msra.mxu0 0.0
        %1920 = vmatprep.subr.mxu0 0.0
        %1921 = vmatpush1.msra.mxu0 0.0
        %1922 = vmatprep.subr.mxu0 0.0
        %1923 = vmatpush1.msra.mxu0 0.0
        %1924 = vmatprep.subr.mxu0 0.0
        %1925 = vmatpush1.msra.mxu0 0.0
        %1926 = vmatprep.subr.mxu0 0.0
        %1927 = vmatpush1.msra.mxu0 0.0
        %1928 = vmatprep.subr.mxu0 0.0
        %1929 = vmatpush1.msra.mxu0 %v1893
        %1930 = vmatprep.subr.mxu0 0.0
        %1931 = vmatpush2.msra.mxu0 0.0
        %1932 = vmatprep.subr.mxu0 0.0
        %1933 = vmatpush2.msra.mxu0 0.0
        %1934 = vmatprep.subr.mxu0 0.0
        %1935 = vmatpush2.msra.mxu0 0.0
        %1936 = vmatprep.subr.mxu0 0.0
        %1937 = vmatpush2.msra.mxu0 0.0
        %1938 = vmatprep.subr.mxu0 0.0
        %1939 = vmatpush2.msra.mxu0 0.0
        %1940 = vmatprep.subr.mxu0 0.0
        %1941 = vmatpush2.msra.mxu0 0.0
        %1942 = vmatprep.subr.mxu0 0.0
        %1943 = vmatpush2.msra.mxu0 0.0
        %1944 = vmatprep.subr.mxu0 0.0
        %1945 = vmatpush2.msra.mxu0 0.0
        %1946 = vmatprep.subr.mxu0 0.0
        %1947 = vmatpush2.msra.mxu0 0.0
        %1948 = vmatprep.subr.mxu0 0.0
        %1949 = vmatpush2.msra.mxu0 0.0
        %1950 = vmatprep.subr.mxu0 0.0
        %1951 = vmatpush2.msra.mxu0 0.0
        %1952 = vmatprep.subr.mxu0 0.0
        %1953 = vmatpush2.msra.mxu0 0.0
        %1954 = vmatprep.subr.mxu0 0.0
        %1955 = vmatpush2.msra.mxu0 0.0
        %1956 = vmatprep.subr.mxu0 0.0
        %1957 = vmatpush2.msra.mxu0 0.0
        %1958 = vmatprep.subr.mxu0 0.0
        %1959 = vmatpush2.msra.mxu0 0.0
        %1960 = vmatprep.subr.mxu0 0.0
        %1961 = vmatpush2.msra.mxu0 0.0
        %1962 = vmatprep.mubr.f32.mxu0 0.0
        %1963 = vmatmul.mubr.f32.gmra.mxu0 %v1896
        %v1964 = vpop.f32.mrf.mxu0
        %v1965 = vadd.f32 0.0, %v1964
        %v1966 = vpop.f32.mrf.mxu0
        %1967 = vdwg.mxu0
        %1968 = vrot.lane.b32.xlu0 %v717, 120
        %v1969 = vpop.permute.xlu0 %1968
        %v1972 = vsel %vm1423, %v1510, 0
        %1974 = vmatprep.subr.mxu0 0.0
        %1975 = vmatpush1.msra.mxu0 0.0
        %1976 = vmatprep.subr.mxu0 0.0
        %1977 = vmatpush1.msra.mxu0 0.0
        %1978 = vmatprep.subr.mxu0 0.0
        %1979 = vmatpush1.msra.mxu0 0.0
        %1980 = vmatprep.subr.mxu0 0.0
        %1981 = vmatpush1.msra.mxu0 0.0
        %1982 = vmatprep.subr.mxu0 0.0
        %1983 = vmatpush1.msra.mxu0 0.0
        %1984 = vmatprep.subr.mxu0 0.0
        %1985 = vmatpush1.msra.mxu0 0.0
        %1986 = vmatprep.subr.mxu0 0.0
        %1987 = vmatpush1.msra.mxu0 0.0
        %1988 = vmatprep.subr.mxu0 0.0
        %1989 = vmatpush1.msra.mxu0 0.0
        %1990 = vmatprep.subr.mxu0 0.0
        %1991 = vmatpush1.msra.mxu0 0.0
        %1992 = vmatprep.subr.mxu0 0.0
        %1993 = vmatpush1.msra.mxu0 0.0
        %1994 = vmatprep.subr.mxu0 0.0
        %1995 = vmatpush1.msra.mxu0 0.0
        %1996 = vmatprep.subr.mxu0 0.0
        %1997 = vmatpush1.msra.mxu0 0.0
        %1998 = vmatprep.subr.mxu0 0.0
        %1999 = vmatpush1.msra.mxu0 0.0
        %2000 = vmatprep.subr.mxu0 0.0
        %2001 = vmatpush1.msra.mxu0 0.0
        %2002 = vmatprep.subr.mxu0 0.0
        %2003 = vmatpush1.msra.mxu0 0.0
        %2004 = vmatprep.subr.mxu0 0.0
        %2005 = vmatpush1.msra.mxu0 %v1969
        %2006 = vmatprep.subr.mxu0 0.0
        %2007 = vmatpush2.msra.mxu0 0.0
        %2008 = vmatprep.subr.mxu0 0.0
        %2009 = vmatpush2.msra.mxu0 0.0
        %2010 = vmatprep.subr.mxu0 0.0
        %2011 = vmatpush2.msra.mxu0 0.0
        %2012 = vmatprep.subr.mxu0 0.0
        %2013 = vmatpush2.msra.mxu0 0.0
        %2014 = vmatprep.subr.mxu0 0.0
        %2015 = vmatpush2.msra.mxu0 0.0
        %2016 = vmatprep.subr.mxu0 0.0
        %2017 = vmatpush2.msra.mxu0 0.0
        %2018 = vmatprep.subr.mxu0 0.0
        %2019 = vmatpush2.msra.mxu0 0.0
        %2020 = vmatprep.subr.mxu0 0.0
        %2021 = vmatpush2.msra.mxu0 0.0
        %2022 = vmatprep.subr.mxu0 0.0
        %2023 = vmatpush2.msra.mxu0 0.0
        %2024 = vmatprep.subr.mxu0 0.0
        %2025 = vmatpush2.msra.mxu0 0.0
        %2026 = vmatprep.subr.mxu0 0.0
        %2027 = vmatpush2.msra.mxu0 0.0
        %2028 = vmatprep.subr.mxu0 0.0
        %2029 = vmatpush2.msra.mxu0 0.0
        %2030 = vmatprep.subr.mxu0 0.0
        %2031 = vmatpush2.msra.mxu0 0.0
        %2032 = vmatprep.subr.mxu0 0.0
        %2033 = vmatpush2.msra.mxu0 0.0
        %2034 = vmatprep.subr.mxu0 0.0
        %2035 = vmatpush2.msra.mxu0 0.0
        %2036 = vmatprep.subr.mxu0 0.0
        %2037 = vmatpush2.msra.mxu0 0.0
        %2038 = vmatprep.mubr.f32.mxu0 0.0
        %2039 = vmatmul.mubr.f32.gmra.mxu0 %v1972
        %v2040 = vpop.f32.mrf.mxu0
        %v2041 = vadd.f32 0.0, %v2040
        %v2042 = vpop.f32.mrf.mxu0
        %2043 = vdwg.mxu0
        %2044 = vrot.lane.b32.xlu0 %v787, 120
        %v2045 = vpop.permute.xlu0 %2044
        %v2048 = vsel %vm1423, %v1511, 0
        %2050 = vmatprep.subr.mxu0 0.0
        %2051 = vmatpush1.msra.mxu0 0.0
        %2052 = vmatprep.subr.mxu0 0.0
        %2053 = vmatpush1.msra.mxu0 0.0
        %2054 = vmatprep.subr.mxu0 0.0
        %2055 = vmatpush1.msra.mxu0 0.0
        %2056 = vmatprep.subr.mxu0 0.0
        %2057 = vmatpush1.msra.mxu0 0.0
        %2058 = vmatprep.subr.mxu0 0.0
        %2059 = vmatpush1.msra.mxu0 0.0
        %2060 = vmatprep.subr.mxu0 0.0
        %2061 = vmatpush1.msra.mxu0 0.0
        %2062 = vmatprep.subr.mxu0 0.0
        %2063 = vmatpush1.msra.mxu0 0.0
        %2064 = vmatprep.subr.mxu0 0.0
        %2065 = vmatpush1.msra.mxu0 0.0
        %2066 = vmatprep.subr.mxu0 0.0
        %2067 = vmatpush1.msra.mxu0 0.0
        %2068 = vmatprep.subr.mxu0 0.0
        %2069 = vmatpush1.msra.mxu0 0.0
        %2070 = vmatprep.subr.mxu0 0.0
        %2071 = vmatpush1.msra.mxu0 0.0
        %2072 = vmatprep.subr.mxu0 0.0
        %2073 = vmatpush1.msra.mxu0 0.0
        %2074 = vmatprep.subr.mxu0 0.0
        %2075 = vmatpush1.msra.mxu0 0.0
        %2076 = vmatprep.subr.mxu0 0.0
        %2077 = vmatpush1.msra.mxu0 0.0
        %2078 = vmatprep.subr.mxu0 0.0
        %2079 = vmatpush1.msra.mxu0 0.0
        %2080 = vmatprep.subr.mxu0 0.0
        %2081 = vmatpush1.msra.mxu0 %v2045
        %2082 = vmatprep.subr.mxu0 0.0
        %2083 = vmatpush2.msra.mxu0 0.0
        %2084 = vmatprep.subr.mxu0 0.0
        %2085 = vmatpush2.msra.mxu0 0.0
        %2086 = vmatprep.subr.mxu0 0.0
        %2087 = vmatpush2.msra.mxu0 0.0
        %2088 = vmatprep.subr.mxu0 0.0
        %2089 = vmatpush2.msra.mxu0 0.0
        %2090 = vmatprep.subr.mxu0 0.0
        %2091 = vmatpush2.msra.mxu0 0.0
        %2092 = vmatprep.subr.mxu0 0.0
        %2093 = vmatpush2.msra.mxu0 0.0
        %2094 = vmatprep.subr.mxu0 0.0
        %2095 = vmatpush2.msra.mxu0 0.0
        %2096 = vmatprep.subr.mxu0 0.0
        %2097 = vmatpush2.msra.mxu0 0.0
        %2098 = vmatprep.subr.mxu0 0.0
        %2099 = vmatpush2.msra.mxu0 0.0
        %2100 = vmatprep.subr.mxu0 0.0
        %2101 = vmatpush2.msra.mxu0 0.0
        %2102 = vmatprep.subr.mxu0 0.0
        %2103 = vmatpush2.msra.mxu0 0.0
        %2104 = vmatprep.subr.mxu0 0.0
        %2105 = vmatpush2.msra.mxu0 0.0
        %2106 = vmatprep.subr.mxu0 0.0
        %2107 = vmatpush2.msra.mxu0 0.0
        %2108 = vmatprep.subr.mxu0 0.0
        %2109 = vmatpush2.msra.mxu0 0.0
        %2110 = vmatprep.subr.mxu0 0.0
        %2111 = vmatpush2.msra.mxu0 0.0
        %2112 = vmatprep.subr.mxu0 0.0
        %2113 = vmatpush2.msra.mxu0 0.0
        %2114 = vmatprep.mubr.f32.mxu0 0.0
        %2115 = vmatmul.mubr.f32.gmra.mxu0 %v2048
        %v2116 = vpop.f32.mrf.mxu0
        %v2117 = vadd.f32 0.0, %v2116
        %v2118 = vpop.f32.mrf.mxu0
        %2119 = vdwg.mxu0
        %v2120 = vld [vmem:[%s2] sm:$0xf]
        %v2121 = vld [vmem:[%s2 + $0x4] sm:$0xf]
        %v2122 = vld [vmem:[%s2 + $0x8] sm:$0xf]
        %v2123 = vld [vmem:[%s2 + $0xc] sm:$0xf]
        %v2124 = vld [vmem:[%s2 + $0x10] sm:$0xf]
        %v2125 = vld [vmem:[%s2 + $0x14] sm:$0xf]
        %v2126 = vld [vmem:[%s2 + $0x18] sm:$0xf]
        %v2127 = vld [vmem:[%s2 + $0x1c] sm:$0xf]
        %v2129 = vsel %vm801, %v1585, 0
        %vm2131 = vcmask 1043456
        %v2133 = vsel %vm2131, %v2120, 0
        %2135 = vmatprep.subr.mxu0 0.0
        %2136 = vmatpush1.msra.mxu0 0.0
        %2137 = vmatprep.subr.mxu0 0.0
        %2138 = vmatpush1.msra.mxu0 0.0
        %2139 = vmatprep.subr.mxu0 0.0
        %2140 = vmatpush1.msra.mxu0 0.0
        %2141 = vmatprep.subr.mxu0 0.0
        %2142 = vmatpush1.msra.mxu0 0.0
        %2143 = vmatprep.subr.mxu0 0.0
        %2144 = vmatpush1.msra.mxu0 0.0
        %2145 = vmatprep.subr.mxu0 0.0
        %2146 = vmatpush1.msra.mxu0 0.0
        %2147 = vmatprep.subr.mxu0 0.0
        %2148 = vmatpush1.msra.mxu0 0.0
        %2149 = vmatprep.subr.mxu0 0.0
        %2150 = vmatpush1.msra.mxu0 0.0
        %2151 = vmatprep.subr.mxu0 0.0
        %2152 = vmatpush1.msra.mxu0 0.0
        %2153 = vmatprep.subr.mxu0 0.0
        %2154 = vmatpush1.msra.mxu0 0.0
        %2155 = vmatprep.subr.mxu0 0.0
        %2156 = vmatpush1.msra.mxu0 0.0
        %2157 = vmatprep.subr.mxu0 0.0
        %2158 = vmatpush1.msra.mxu0 0.0
        %2159 = vmatprep.subr.mxu0 0.0
        %2160 = vmatpush1.msra.mxu0 0.0
        %2161 = vmatprep.subr.mxu0 0.0
        %2162 = vmatpush1.msra.mxu0 0.0
        %2163 = vmatprep.subr.mxu0 0.0
        %2164 = vmatpush1.msra.mxu0 0.0
        %2165 = vmatprep.subr.mxu0 0.0
        %2166 = vmatpush1.msra.mxu0 %v2133
        %2167 = vmatprep.subr.mxu0 0.0
        %2168 = vmatpush2.msra.mxu0 0.0
        %2169 = vmatprep.subr.mxu0 0.0
        %2170 = vmatpush2.msra.mxu0 0.0
        %2171 = vmatprep.subr.mxu0 0.0
        %2172 = vmatpush2.msra.mxu0 0.0
        %2173 = vmatprep.subr.mxu0 0.0
        %2174 = vmatpush2.msra.mxu0 0.0
        %2175 = vmatprep.subr.mxu0 0.0
        %2176 = vmatpush2.msra.mxu0 0.0
        %2177 = vmatprep.subr.mxu0 0.0
        %2178 = vmatpush2.msra.mxu0 0.0
        %2179 = vmatprep.subr.mxu0 0.0
        %2180 = vmatpush2.msra.mxu0 0.0
        %2181 = vmatprep.subr.mxu0 0.0
        %2182 = vmatpush2.msra.mxu0 0.0
        %2183 = vmatprep.subr.mxu0 0.0
        %2184 = vmatpush2.msra.mxu0 0.0
        %2185 = vmatprep.subr.mxu0 0.0
        %2186 = vmatpush2.msra.mxu0 0.0
        %2187 = vmatprep.subr.mxu0 0.0
        %2188 = vmatpush2.msra.mxu0 0.0
        %2189 = vmatprep.subr.mxu0 0.0
        %2190 = vmatpush2.msra.mxu0 0.0
        %2191 = vmatprep.subr.mxu0 0.0
        %2192 = vmatpush2.msra.mxu0 0.0
        %2193 = vmatprep.subr.mxu0 0.0
        %2194 = vmatpush2.msra.mxu0 0.0
        %2195 = vmatprep.subr.mxu0 0.0
        %2196 = vmatpush2.msra.mxu0 0.0
        %2197 = vmatprep.subr.mxu0 0.0
        %2198 = vmatpush2.msra.mxu0 0.0
        %2199 = vmatprep.mubr.f32.mxu0 0.0
        %2200 = vmatmul.mubr.f32.gmra.mxu0 %v2129
        %v2201 = vpop.f32.mrf.mxu0
        %v2202 = vadd.f32 0.0, %v2201
        %v2203 = vpop.f32.mrf.mxu0
        %2204 = vdwg.mxu0
        %v2206 = vsel %vm801, %v1661, 0
        %v2209 = vsel %vm2131, %v2121, 0
        %2211 = vmatprep.subr.mxu0 0.0
        %2212 = vmatpush1.msra.mxu0 0.0
        %2213 = vmatprep.subr.mxu0 0.0
        %2214 = vmatpush1.msra.mxu0 0.0
        %2215 = vmatprep.subr.mxu0 0.0
        %2216 = vmatpush1.msra.mxu0 0.0
        %2217 = vmatprep.subr.mxu0 0.0
        %2218 = vmatpush1.msra.mxu0 0.0
        %2219 = vmatprep.subr.mxu0 0.0
        %2220 = vmatpush1.msra.mxu0 0.0
        %2221 = vmatprep.subr.mxu0 0.0
        %2222 = vmatpush1.msra.mxu0 0.0
        %2223 = vmatprep.subr.mxu0 0.0
        %2224 = vmatpush1.msra.mxu0 0.0
        %2225 = vmatprep.subr.mxu0 0.0
        %2226 = vmatpush1.msra.mxu0 0.0
        %2227 = vmatprep.subr.mxu0 0.0
        %2228 = vmatpush1.msra.mxu0 0.0
        %2229 = vmatprep.subr.mxu0 0.0
        %2230 = vmatpush1.msra.mxu0 0.0
        %2231 = vmatprep.subr.mxu0 0.0
        %2232 = vmatpush1.msra.mxu0 0.0
        %2233 = vmatprep.subr.mxu0 0.0
        %2234 = vmatpush1.msra.mxu0 0.0
        %2235 = vmatprep.subr.mxu0 0.0
        %2236 = vmatpush1.msra.mxu0 0.0
        %2237 = vmatprep.subr.mxu0 0.0
        %2238 = vmatpush1.msra.mxu0 0.0
        %2239 = vmatprep.subr.mxu0 0.0
        %2240 = vmatpush1.msra.mxu0 0.0
        %2241 = vmatprep.subr.mxu0 0.0
        %2242 = vmatpush1.msra.mxu0 %v2209
        %2243 = vmatprep.subr.mxu0 0.0
        %2244 = vmatpush2.msra.mxu0 0.0
        %2245 = vmatprep.subr.mxu0 0.0
        %2246 = vmatpush2.msra.mxu0 0.0
        %2247 = vmatprep.subr.mxu0 0.0
        %2248 = vmatpush2.msra.mxu0 0.0
        %2249 = vmatprep.subr.mxu0 0.0
        %2250 = vmatpush2.msra.mxu0 0.0
        %2251 = vmatprep.subr.mxu0 0.0
        %2252 = vmatpush2.msra.mxu0 0.0
        %2253 = vmatprep.subr.mxu0 0.0
        %2254 = vmatpush2.msra.mxu0 0.0
        %2255 = vmatprep.subr.mxu0 0.0
        %2256 = vmatpush2.msra.mxu0 0.0
        %2257 = vmatprep.subr.mxu0 0.0
        %2258 = vmatpush2.msra.mxu0 0.0
        %2259 = vmatprep.subr.mxu0 0.0
        %2260 = vmatpush2.msra.mxu0 0.0
        %2261 = vmatprep.subr.mxu0 0.0
        %2262 = vmatpush2.msra.mxu0 0.0
        %2263 = vmatprep.subr.mxu0 0.0
        %2264 = vmatpush2.msra.mxu0 0.0
        %2265 = vmatprep.subr.mxu0 0.0
        %2266 = vmatpush2.msra.mxu0 0.0
        %2267 = vmatprep.subr.mxu0 0.0
        %2268 = vmatpush2.msra.mxu0 0.0
        %2269 = vmatprep.subr.mxu0 0.0
        %2270 = vmatpush2.msra.mxu0 0.0
        %2271 = vmatprep.subr.mxu0 0.0
        %2272 = vmatpush2.msra.mxu0 0.0
        %2273 = vmatprep.subr.mxu0 0.0
        %2274 = vmatpush2.msra.mxu0 0.0
        %2275 = vmatprep.mubr.f32.mxu0 0.0
        %2276 = vmatmul.mubr.f32.gmra.mxu0 %v2206
        %v2277 = vpop.f32.mrf.mxu0
        %v2278 = vadd.f32 0.0, %v2277
        %v2279 = vpop.f32.mrf.mxu0
        %2280 = vdwg.mxu0
        %v2282 = vsel %vm801, %v1737, 0
        %v2285 = vsel %vm2131, %v2122, 0
        %2287 = vmatprep.subr.mxu0 0.0
        %2288 = vmatpush1.msra.mxu0 0.0
        %2289 = vmatprep.subr.mxu0 0.0
        %2290 = vmatpush1.msra.mxu0 0.0
        %2291 = vmatprep.subr.mxu0 0.0
        %2292 = vmatpush1.msra.mxu0 0.0
        %2293 = vmatprep.subr.mxu0 0.0
        %2294 = vmatpush1.msra.mxu0 0.0
        %2295 = vmatprep.subr.mxu0 0.0
        %2296 = vmatpush1.msra.mxu0 0.0
        %2297 = vmatprep.subr.mxu0 0.0
        %2298 = vmatpush1.msra.mxu0 0.0
        %2299 = vmatprep.subr.mxu0 0.0
        %2300 = vmatpush1.msra.mxu0 0.0
        %2301 = vmatprep.subr.mxu0 0.0
        %2302 = vmatpush1.msra.mxu0 0.0
        %2303 = vmatprep.subr.mxu0 0.0
        %2304 = vmatpush1.msra.mxu0 0.0
        %2305 = vmatprep.subr.mxu0 0.0
        %2306 = vmatpush1.msra.mxu0 0.0
        %2307 = vmatprep.subr.mxu0 0.0
        %2308 = vmatpush1.msra.mxu0 0.0
        %2309 = vmatprep.subr.mxu0 0.0
        %2310 = vmatpush1.msra.mxu0 0.0
        %2311 = vmatprep.subr.mxu0 0.0
        %2312 = vmatpush1.msra.mxu0 0.0
        %2313 = vmatprep.subr.mxu0 0.0
        %2314 = vmatpush1.msra.mxu0 0.0
        %2315 = vmatprep.subr.mxu0 0.0
        %2316 = vmatpush1.msra.mxu0 0.0
        %2317 = vmatprep.subr.mxu0 0.0
        %2318 = vmatpush1.msra.mxu0 %v2285
        %2319 = vmatprep.subr.mxu0 0.0
        %2320 = vmatpush2.msra.mxu0 0.0
        %2321 = vmatprep.subr.mxu0 0.0
        %2322 = vmatpush2.msra.mxu0 0.0
        %2323 = vmatprep.subr.mxu0 0.0
        %2324 = vmatpush2.msra.mxu0 0.0
        %2325 = vmatprep.subr.mxu0 0.0
        %2326 = vmatpush2.msra.mxu0 0.0
        %2327 = vmatprep.subr.mxu0 0.0
        %2328 = vmatpush2.msra.mxu0 0.0
        %2329 = vmatprep.subr.mxu0 0.0
        %2330 = vmatpush2.msra.mxu0 0.0
        %2331 = vmatprep.subr.mxu0 0.0
        %2332 = vmatpush2.msra.mxu0 0.0
        %2333 = vmatprep.subr.mxu0 0.0
        %2334 = vmatpush2.msra.mxu0 0.0
        %2335 = vmatprep.subr.mxu0 0.0
        %2336 = vmatpush2.msra.mxu0 0.0
        %2337 = vmatprep.subr.mxu0 0.0
        %2338 = vmatpush2.msra.mxu0 0.0
        %2339 = vmatprep.subr.mxu0 0.0
        %2340 = vmatpush2.msra.mxu0 0.0
        %2341 = vmatprep.subr.mxu0 0.0
        %2342 = vmatpush2.msra.mxu0 0.0
        %2343 = vmatprep.subr.mxu0 0.0
        %2344 = vmatpush2.msra.mxu0 0.0
        %2345 = vmatprep.subr.mxu0 0.0
        %2346 = vmatpush2.msra.mxu0 0.0
        %2347 = vmatprep.subr.mxu0 0.0
        %2348 = vmatpush2.msra.mxu0 0.0
        %2349 = vmatprep.subr.mxu0 0.0
        %2350 = vmatpush2.msra.mxu0 0.0
        %2351 = vmatprep.mubr.f32.mxu0 0.0
        %2352 = vmatmul.mubr.f32.gmra.mxu0 %v2282
        %v2353 = vpop.f32.mrf.mxu0
        %v2354 = vadd.f32 0.0, %v2353
        %v2355 = vpop.f32.mrf.mxu0
        %2356 = vdwg.mxu0
        %v2358 = vsel %vm801, %v1813, 0
        %v2361 = vsel %vm2131, %v2123, 0
        %2363 = vmatprep.subr.mxu0 0.0
        %2364 = vmatpush1.msra.mxu0 0.0
        %2365 = vmatprep.subr.mxu0 0.0
        %2366 = vmatpush1.msra.mxu0 0.0
        %2367 = vmatprep.subr.mxu0 0.0
        %2368 = vmatpush1.msra.mxu0 0.0
        %2369 = vmatprep.subr.mxu0 0.0
        %2370 = vmatpush1.msra.mxu0 0.0
        %2371 = vmatprep.subr.mxu0 0.0
        %2372 = vmatpush1.msra.mxu0 0.0
        %2373 = vmatprep.subr.mxu0 0.0
        %2374 = vmatpush1.msra.mxu0 0.0
        %2375 = vmatprep.subr.mxu0 0.0
        %2376 = vmatpush1.msra.mxu0 0.0
        %2377 = vmatprep.subr.mxu0 0.0
        %2378 = vmatpush1.msra.mxu0 0.0
        %2379 = vmatprep.subr.mxu0 0.0
        %2380 = vmatpush1.msra.mxu0 0.0
        %2381 = vmatprep.subr.mxu0 0.0
        %2382 = vmatpush1.msra.mxu0 0.0
        %2383 = vmatprep.subr.mxu0 0.0
        %2384 = vmatpush1.msra.mxu0 0.0
        %2385 = vmatprep.subr.mxu0 0.0
        %2386 = vmatpush1.msra.mxu0 0.0
        %2387 = vmatprep.subr.mxu0 0.0
        %2388 = vmatpush1.msra.mxu0 0.0
        %2389 = vmatprep.subr.mxu0 0.0
        %2390 = vmatpush1.msra.mxu0 0.0
        %2391 = vmatprep.subr.mxu0 0.0
        %2392 = vmatpush1.msra.mxu0 0.0
        %2393 = vmatprep.subr.mxu0 0.0
        %2394 = vmatpush1.msra.mxu0 %v2361
        %2395 = vmatprep.subr.mxu0 0.0
        %2396 = vmatpush2.msra.mxu0 0.0
        %2397 = vmatprep.subr.mxu0 0.0
        %2398 = vmatpush2.msra.mxu0 0.0
        %2399 = vmatprep.subr.mxu0 0.0
        %2400 = vmatpush2.msra.mxu0 0.0
        %2401 = vmatprep.subr.mxu0 0.0
        %2402 = vmatpush2.msra.mxu0 0.0
        %2403 = vmatprep.subr.mxu0 0.0
        %2404 = vmatpush2.msra.mxu0 0.0
        %2405 = vmatprep.subr.mxu0 0.0
        %2406 = vmatpush2.msra.mxu0 0.0
        %2407 = vmatprep.subr.mxu0 0.0
        %2408 = vmatpush2.msra.mxu0 0.0
        %2409 = vmatprep.subr.mxu0 0.0
        %2410 = vmatpush2.msra.mxu0 0.0
        %2411 = vmatprep.subr.mxu0 0.0
        %2412 = vmatpush2.msra.mxu0 0.0
        %2413 = vmatprep.subr.mxu0 0.0
        %2414 = vmatpush2.msra.mxu0 0.0
        %2415 = vmatprep.subr.mxu0 0.0
        %2416 = vmatpush2.msra.mxu0 0.0
        %2417 = vmatprep.subr.mxu0 0.0
        %2418 = vmatpush2.msra.mxu0 0.0
        %2419 = vmatprep.subr.mxu0 0.0
        %2420 = vmatpush2.msra.mxu0 0.0
        %2421 = vmatprep.subr.mxu0 0.0
        %2422 = vmatpush2.msra.mxu0 0.0
        %2423 = vmatprep.subr.mxu0 0.0
        %2424 = vmatpush2.msra.mxu0 0.0
        %2425 = vmatprep.subr.mxu0 0.0
        %2426 = vmatpush2.msra.mxu0 0.0
        %2427 = vmatprep.mubr.f32.mxu0 0.0
        %2428 = vmatmul.mubr.f32.gmra.mxu0 %v2358
        %v2429 = vpop.f32.mrf.mxu0
        %v2430 = vadd.f32 0.0, %v2429
        %v2431 = vpop.f32.mrf.mxu0
        %2432 = vdwg.mxu0
        %v2434 = vsel %vm801, %v1889, 0
        %v2437 = vsel %vm2131, %v2124, 0
        %2439 = vmatprep.subr.mxu0 0.0
        %2440 = vmatpush1.msra.mxu0 0.0
        %2441 = vmatprep.subr.mxu0 0.0
        %2442 = vmatpush1.msra.mxu0 0.0
        %2443 = vmatprep.subr.mxu0 0.0
        %2444 = vmatpush1.msra.mxu0 0.0
        %2445 = vmatprep.subr.mxu0 0.0
        %2446 = vmatpush1.msra.mxu0 0.0
        %2447 = vmatprep.subr.mxu0 0.0
        %2448 = vmatpush1.msra.mxu0 0.0
        %2449 = vmatprep.subr.mxu0 0.0
        %2450 = vmatpush1.msra.mxu0 0.0
        %2451 = vmatprep.subr.mxu0 0.0
        %2452 = vmatpush1.msra.mxu0 0.0
        %2453 = vmatprep.subr.mxu0 0.0
        %2454 = vmatpush1.msra.mxu0 0.0
        %2455 = vmatprep.subr.mxu0 0.0
        %2456 = vmatpush1.msra.mxu0 0.0
        %2457 = vmatprep.subr.mxu0 0.0
        %2458 = vmatpush1.msra.mxu0 0.0
        %2459 = vmatprep.subr.mxu0 0.0
        %2460 = vmatpush1.msra.mxu0 0.0
        %2461 = vmatprep.subr.mxu0 0.0
        %2462 = vmatpush1.msra.mxu0 0.0
        %2463 = vmatprep.subr.mxu0 0.0
        %2464 = vmatpush1.msra.mxu0 0.0
        %2465 = vmatprep.subr.mxu0 0.0
        %2466 = vmatpush1.msra.mxu0 0.0
        %2467 = vmatprep.subr.mxu0 0.0
        %2468 = vmatpush1.msra.mxu0 0.0
        %2469 = vmatprep.subr.mxu0 0.0
        %2470 = vmatpush1.msra.mxu0 %v2437
        %2471 = vmatprep.subr.mxu0 0.0
        %2472 = vmatpush2.msra.mxu0 0.0
        %2473 = vmatprep.subr.mxu0 0.0
        %2474 = vmatpush2.msra.mxu0 0.0
        %2475 = vmatprep.subr.mxu0 0.0
        %2476 = vmatpush2.msra.mxu0 0.0
        %2477 = vmatprep.subr.mxu0 0.0
        %2478 = vmatpush2.msra.mxu0 0.0
        %2479 = vmatprep.subr.mxu0 0.0
        %2480 = vmatpush2.msra.mxu0 0.0
        %2481 = vmatprep.subr.mxu0 0.0
        %2482 = vmatpush2.msra.mxu0 0.0
        %2483 = vmatprep.subr.mxu0 0.0
        %2484 = vmatpush2.msra.mxu0 0.0
        %2485 = vmatprep.subr.mxu0 0.0
        %2486 = vmatpush2.msra.mxu0 0.0
        %2487 = vmatprep.subr.mxu0 0.0
        %2488 = vmatpush2.msra.mxu0 0.0
        %2489 = vmatprep.subr.mxu0 0.0
        %2490 = vmatpush2.msra.mxu0 0.0
        %2491 = vmatprep.subr.mxu0 0.0
        %2492 = vmatpush2.msra.mxu0 0.0
        %2493 = vmatprep.subr.mxu0 0.0
        %2494 = vmatpush2.msra.mxu0 0.0
        %2495 = vmatprep.subr.mxu0 0.0
        %2496 = vmatpush2.msra.mxu0 0.0
        %2497 = vmatprep.subr.mxu0 0.0
        %2498 = vmatpush2.msra.mxu0 0.0
        %2499 = vmatprep.subr.mxu0 0.0
        %2500 = vmatpush2.msra.mxu0 0.0
        %2501 = vmatprep.subr.mxu0 0.0
        %2502 = vmatpush2.msra.mxu0 0.0
        %2503 = vmatprep.mubr.f32.mxu0 0.0
        %2504 = vmatmul.mubr.f32.gmra.mxu0 %v2434
        %v2505 = vpop.f32.mrf.mxu0
        %v2506 = vadd.f32 0.0, %v2505
        %v2507 = vpop.f32.mrf.mxu0
        %2508 = vdwg.mxu0
        %v2510 = vsel %vm801, %v1965, 0
        %v2513 = vsel %vm2131, %v2125, 0
        %2515 = vmatprep.subr.mxu0 0.0
        %2516 = vmatpush1.msra.mxu0 0.0
        %2517 = vmatprep.subr.mxu0 0.0
        %2518 = vmatpush1.msra.mxu0 0.0
        %2519 = vmatprep.subr.mxu0 0.0
        %2520 = vmatpush1.msra.mxu0 0.0
        %2521 = vmatprep.subr.mxu0 0.0
        %2522 = vmatpush1.msra.mxu0 0.0
        %2523 = vmatprep.subr.mxu0 0.0
        %2524 = vmatpush1.msra.mxu0 0.0
        %2525 = vmatprep.subr.mxu0 0.0
        %2526 = vmatpush1.msra.mxu0 0.0
        %2527 = vmatprep.subr.mxu0 0.0
        %2528 = vmatpush1.msra.mxu0 0.0
        %2529 = vmatprep.subr.mxu0 0.0
        %2530 = vmatpush1.msra.mxu0 0.0
        %2531 = vmatprep.subr.mxu0 0.0
        %2532 = vmatpush1.msra.mxu0 0.0
        %2533 = vmatprep.subr.mxu0 0.0
        %2534 = vmatpush1.msra.mxu0 0.0
        %2535 = vmatprep.subr.mxu0 0.0
        %2536 = vmatpush1.msra.mxu0 0.0
        %2537 = vmatprep.subr.mxu0 0.0
        %2538 = vmatpush1.msra.mxu0 0.0
        %2539 = vmatprep.subr.mxu0 0.0
        %2540 = vmatpush1.msra.mxu0 0.0
        %2541 = vmatprep.subr.mxu0 0.0
        %2542 = vmatpush1.msra.mxu0 0.0
        %2543 = vmatprep.subr.mxu0 0.0
        %2544 = vmatpush1.msra.mxu0 0.0
        %2545 = vmatprep.subr.mxu0 0.0
        %2546 = vmatpush1.msra.mxu0 %v2513
        %2547 = vmatprep.subr.mxu0 0.0
        %2548 = vmatpush2.msra.mxu0 0.0
        %2549 = vmatprep.subr.mxu0 0.0
        %2550 = vmatpush2.msra.mxu0 0.0
        %2551 = vmatprep.subr.mxu0 0.0
        %2552 = vmatpush2.msra.mxu0 0.0
        %2553 = vmatprep.subr.mxu0 0.0
        %2554 = vmatpush2.msra.mxu0 0.0
        %2555 = vmatprep.subr.mxu0 0.0
        %2556 = vmatpush2.msra.mxu0 0.0
        %2557 = vmatprep.subr.mxu0 0.0
        %2558 = vmatpush2.msra.mxu0 0.0
        %2559 = vmatprep.subr.mxu0 0.0
        %2560 = vmatpush2.msra.mxu0 0.0
        %2561 = vmatprep.subr.mxu0 0.0
        %2562 = vmatpush2.msra.mxu0 0.0
        %2563 = vmatprep.subr.mxu0 0.0
        %2564 = vmatpush2.msra.mxu0 0.0
        %2565 = vmatprep.subr.mxu0 0.0
        %2566 = vmatpush2.msra.mxu0 0.0
        %2567 = vmatprep.subr.mxu0 0.0
        %2568 = vmatpush2.msra.mxu0 0.0
        %2569 = vmatprep.subr.mxu0 0.0
        %2570 = vmatpush2.msra.mxu0 0.0
        %2571 = vmatprep.subr.mxu0 0.0
        %2572 = vmatpush2.msra.mxu0 0.0
        %2573 = vmatprep.subr.mxu0 0.0
        %2574 = vmatpush2.msra.mxu0 0.0
        %2575 = vmatprep.subr.mxu0 0.0
        %2576 = vmatpush2.msra.mxu0 0.0
        %2577 = vmatprep.subr.mxu0 0.0
        %2578 = vmatpush2.msra.mxu0 0.0
        %2579 = vmatprep.mubr.f32.mxu0 0.0
        %2580 = vmatmul.mubr.f32.gmra.mxu0 %v2510
        %v2581 = vpop.f32.mrf.mxu0
        %v2582 = vadd.f32 0.0, %v2581
        %v2583 = vpop.f32.mrf.mxu0
        %2584 = vdwg.mxu0
        %v2586 = vsel %vm801, %v2041, 0
        %v2589 = vsel %vm2131, %v2126, 0
        %2591 = vmatprep.subr.mxu0 0.0
        %2592 = vmatpush1.msra.mxu0 0.0
        %2593 = vmatprep.subr.mxu0 0.0
        %2594 = vmatpush1.msra.mxu0 0.0
        %2595 = vmatprep.subr.mxu0 0.0
        %2596 = vmatpush1.msra.mxu0 0.0
        %2597 = vmatprep.subr.mxu0 0.0
        %2598 = vmatpush1.msra.mxu0 0.0
        %2599 = vmatprep.subr.mxu0 0.0
        %2600 = vmatpush1.msra.mxu0 0.0
        %2601 = vmatprep.subr.mxu0 0.0
        %2602 = vmatpush1.msra.mxu0 0.0
        %2603 = vmatprep.subr.mxu0 0.0
        %2604 = vmatpush1.msra.mxu0 0.0
        %2605 = vmatprep.subr.mxu0 0.0
        %2606 = vmatpush1.msra.mxu0 0.0
        %2607 = vmatprep.subr.mxu0 0.0
        %2608 = vmatpush1.msra.mxu0 0.0
        %2609 = vmatprep.subr.mxu0 0.0
        %2610 = vmatpush1.msra.mxu0 0.0
        %2611 = vmatprep.subr.mxu0 0.0
        %2612 = vmatpush1.msra.mxu0 0.0
        %2613 = vmatprep.subr.mxu0 0.0
        %2614 = vmatpush1.msra.mxu0 0.0
        %2615 = vmatprep.subr.mxu0 0.0
        %2616 = vmatpush1.msra.mxu0 0.0
        %2617 = vmatprep.subr.mxu0 0.0
        %2618 = vmatpush1.msra.mxu0 0.0
        %2619 = vmatprep.subr.mxu0 0.0
        %2620 = vmatpush1.msra.mxu0 0.0
        %2621 = vmatprep.subr.mxu0 0.0
        %2622 = vmatpush1.msra.mxu0 %v2589
        %2623 = vmatprep.subr.mxu0 0.0
        %2624 = vmatpush2.msra.mxu0 0.0
        %2625 = vmatprep.subr.mxu0 0.0
        %2626 = vmatpush2.msra.mxu0 0.0
        %2627 = vmatprep.subr.mxu0 0.0
        %2628 = vmatpush2.msra.mxu0 0.0
        %2629 = vmatprep.subr.mxu0 0.0
        %2630 = vmatpush2.msra.mxu0 0.0
        %2631 = vmatprep.subr.mxu0 0.0
        %2632 = vmatpush2.msra.mxu0 0.0
        %2633 = vmatprep.subr.mxu0 0.0
        %2634 = vmatpush2.msra.mxu0 0.0
        %2635 = vmatprep.subr.mxu0 0.0
        %2636 = vmatpush2.msra.mxu0 0.0
        %2637 = vmatprep.subr.mxu0 0.0
        %2638 = vmatpush2.msra.mxu0 0.0
        %2639 = vmatprep.subr.mxu0 0.0
        %2640 = vmatpush2.msra.mxu0 0.0
        %2641 = vmatprep.subr.mxu0 0.0
        %2642 = vmatpush2.msra.mxu0 0.0
        %2643 = vmatprep.subr.mxu0 0.0
        %2644 = vmatpush2.msra.mxu0 0.0
        %2645 = vmatprep.subr.mxu0 0.0
        %2646 = vmatpush2.msra.mxu0 0.0
        %2647 = vmatprep.subr.mxu0 0.0
        %2648 = vmatpush2.msra.mxu0 0.0
        %2649 = vmatprep.subr.mxu0 0.0
        %2650 = vmatpush2.msra.mxu0 0.0
        %2651 = vmatprep.subr.mxu0 0.0
        %2652 = vmatpush2.msra.mxu0 0.0
        %2653 = vmatprep.subr.mxu0 0.0
        %2654 = vmatpush2.msra.mxu0 0.0
        %2655 = vmatprep.mubr.f32.mxu0 0.0
        %2656 = vmatmul.mubr.f32.gmra.mxu0 %v2586
        %v2657 = vpop.f32.mrf.mxu0
        %v2658 = vadd.f32 0.0, %v2657
        %v2659 = vpop.f32.mrf.mxu0
        %2660 = vdwg.mxu0
        %v2662 = vsel %vm801, %v2117, 0
        %v2665 = vsel %vm2131, %v2127, 0
        %2667 = vmatprep.subr.mxu0 0.0
        %2668 = vmatpush1.msra.mxu0 0.0
        %2669 = vmatprep.subr.mxu0 0.0
        %2670 = vmatpush1.msra.mxu0 0.0
        %2671 = vmatprep.subr.mxu0 0.0
        %2672 = vmatpush1.msra.mxu0 0.0
        %2673 = vmatprep.subr.mxu0 0.0
        %2674 = vmatpush1.msra.mxu0 0.0
        %2675 = vmatprep.subr.mxu0 0.0
        %2676 = vmatpush1.msra.mxu0 0.0
        %2677 = vmatprep.subr.mxu0 0.0
        %2678 = vmatpush1.msra.mxu0 0.0
        %2679 = vmatprep.subr.mxu0 0.0
        %2680 = vmatpush1.msra.mxu0 0.0
        %2681 = vmatprep.subr.mxu0 0.0
        %2682 = vmatpush1.msra.mxu0 0.0
        %2683 = vmatprep.subr.mxu0 0.0
        %2684 = vmatpush1.msra.mxu0 0.0
        %2685 = vmatprep.subr.mxu0 0.0
        %2686 = vmatpush1.msra.mxu0 0.0
        %2687 = vmatprep.subr.mxu0 0.0
        %2688 = vmatpush1.msra.mxu0 0.0
        %2689 = vmatprep.subr.mxu0 0.0
        %2690 = vmatpush1.msra.mxu0 0.0
        %2691 = vmatprep.subr.mxu0 0.0
        %2692 = vmatpush1.msra.mxu0 0.0
        %2693 = vmatprep.subr.mxu0 0.0
        %2694 = vmatpush1.msra.mxu0 0.0
        %2695 = vmatprep.subr.mxu0 0.0
        %2696 = vmatpush1.msra.mxu0 0.0
        %2697 = vmatprep.subr.mxu0 0.0
        %2698 = vmatpush1.msra.mxu0 %v2665
        %2699 = vmatprep.subr.mxu0 0.0
        %2700 = vmatpush2.msra.mxu0 0.0
        %2701 = vmatprep.subr.mxu0 0.0
        %2702 = vmatpush2.msra.mxu0 0.0
        %2703 = vmatprep.subr.mxu0 0.0
        %2704 = vmatpush2.msra.mxu0 0.0
        %2705 = vmatprep.subr.mxu0 0.0
        %2706 = vmatpush2.msra.mxu0 0.0
        %2707 = vmatprep.subr.mxu0 0.0
        %2708 = vmatpush2.msra.mxu0 0.0
        %2709 = vmatprep.subr.mxu0 0.0
        %2710 = vmatpush2.msra.mxu0 0.0
        %2711 = vmatprep.subr.mxu0 0.0
        %2712 = vmatpush2.msra.mxu0 0.0
        %2713 = vmatprep.subr.mxu0 0.0
        %2714 = vmatpush2.msra.mxu0 0.0
        %2715 = vmatprep.subr.mxu0 0.0
        %2716 = vmatpush2.msra.mxu0 0.0
        %2717 = vmatprep.subr.mxu0 0.0
        %2718 = vmatpush2.msra.mxu0 0.0
        %2719 = vmatprep.subr.mxu0 0.0
        %2720 = vmatpush2.msra.mxu0 0.0
        %2721 = vmatprep.subr.mxu0 0.0
        %2722 = vmatpush2.msra.mxu0 0.0
        %2723 = vmatprep.subr.mxu0 0.0
        %2724 = vmatpush2.msra.mxu0 0.0
        %2725 = vmatprep.subr.mxu0 0.0
        %2726 = vmatpush2.msra.mxu0 0.0
        %2727 = vmatprep.subr.mxu0 0.0
        %2728 = vmatpush2.msra.mxu0 0.0
        %2729 = vmatprep.subr.mxu0 0.0
        %2730 = vmatpush2.msra.mxu0 0.0
        %2731 = vmatprep.mubr.f32.mxu0 0.0
        %2732 = vmatmul.mubr.f32.gmra.mxu0 %v2662
        %v2733 = vpop.f32.mrf.mxu0
        %v2734 = vadd.f32 0.0, %v2733
        %v2735 = vpop.f32.mrf.mxu0
        %2736 = vdwg.mxu0
        %v2737 = vsel %vm226, %v2202, 0.0
        %v2738 = vsel %vm226, %v2278, 0.0
        %v2739 = vadd.f32 %v2737, %v2738
        %v2740 = vsel %vm226, %v2354, 0.0
        %v2741 = vadd.f32 %v2739, %v2740
        %v2742 = vsel %vm226, %v2430, 0.0
        %v2743 = vadd.f32 %v2741, %v2742
        %v2744 = vsel %vm226, %v2506, 0.0
        %v2745 = vadd.f32 %v2743, %v2744
        %v2746 = vsel %vm226, %v2582, 0.0
        %v2747 = vadd.f32 %v2745, %v2746
        %v2748 = vsel %vm226, %v2658, 0.0
        %v2749 = vadd.f32 %v2747, %v2748
        %v2750 = vsel %vm226, %v2734, 0.0
        %v2751 = vadd.f32 %v2749, %v2750
        %v2752 = vld [vmem:[%s3] sm:$0x1]
        %v2754 = vlaneseq
        %v2755 = vshrl.u32 %v2754, 7
        %v2756 = vsub.s32 0, %v2755
        %v2757 = vrot.slane %v2752, %v2756
        %v2759 = vadd.f32 %v2751, %v2757
        %2760 = vst.msk [vmem:[%s188] sm:$0xff] %vm226, %v2759
        %s2761 = sand.u32 %s115, 1
        %s2762 = scalar_lea.sflag [#allocation3], %s2761
        %s2763 = sand.u32 %s115, 1
        %s2764 = smul.addr %s2763, 8
        %s2765 = scalar_lea.vmem [#allocation2], %s2764
        // Predicated region
        $region37: #{tpu_custom_call.1} parent=35 // pred_check
          %p2766 = pneg %p125
        $region38: #{tpu_custom_call.1} parent=35 // pred_check_branch
          %2768 = sbr.rel (%p2766) target = $region40
        $region39: #{tpu_custom_call.1} parent=35 // pred_region
          %s2770 = ssub.s32 128, 128
          %2771 = vsyncadd %s2762, %s2770
          %s2772 = smul.addr %s18, 128
          %s2773 = scalar_lea.hbm %s4, %s2772
          %s2775 = sshll.u32 %s2765, 4
          %s2776 = int_to_ptr.vmem [resolvable:$true] %s2775
          %2778 = dma.vmem_to_hbm [thread:$0]  %s2776, 128, %s2773, %s2762
        $region40: #{tpu_custom_call.1} parent=35 // pred_fallthru
          _
      $region36: #{tpu_custom_call.1} parent=5 // pred_fallthru
        _
      %p2779 = scmp.le.s32.totalorder 2, %s13
      // Predicated region
      $region41: #{tpu_custom_call.1} parent=5 // pred_check
        %p2780 = pneg %p2779
      $region42: #{tpu_custom_call.1} parent=5 // pred_check_branch
        %2782 = sbr.rel (%p2780) target = $region44
      $region43: #{tpu_custom_call.1} parent=5 // pred_region
        %s2783 = ssub.s32 %s13, 2
        // Predicated region
        $region45: #{tpu_custom_call.1} parent=43 // pred_check
          %p2784 = pneg %p131
        $region46: #{tpu_custom_call.1} parent=43 // pred_check_branch
          %2786 = sbr.rel (%p2784) target = $region48
        $region47: #{tpu_custom_call.1} parent=43 // pred_region
          %s2787 = sand.u32 %s116, 1
          %s2788 = scalar_lea.sflag [#allocation3], %s2787
          %s2789 = sand.u32 %s116, 1
          %s2790 = smul.addr %s2789, 8
          %s2791 = scalar_lea.vmem [#allocation2], %s2790
          %2792 = dma.done %s2788, 128
        $region48: #{tpu_custom_call.1} parent=43 // pred_fallthru
          _
      $region44: #{tpu_custom_call.1} parent=5 // pred_fallthru
        _
    $region6: #{tpu_custom_call.1} parent=1 // loop_footer
      %s17 = sadd.s32 1, %s13
    $region7: #{tpu_custom_call.1} parent=1 // loop_footer_branch
      %12 = sbr.rel target = $region3
    $region8: #{tpu_custom_call.1} parent=1 // loop_exit
      _
    %2793 = vsyncpa [#allocation3], 1
    %s2794 = scalar_lea.sflag [#allocation3], 1
    %2795 = vsyncpa %s2794, 1

</llo_original>
